<compile_context>
chip_gen: v6e
topology: v6e:2x2x1
jax: 0.10.0
libtpu: 0.0.40
codegen_flags: <defaults>
</compile_context>

<pallas_src>
import functools

import jax
import jax.numpy as jnp
from jax import lax
from jax.experimental import pallas as pl
from jax.experimental.pallas import tpu as pltpu

_LN_EPS = 1e-5
_VMEM_LIMIT = 48 * 1024 * 1024  # leave headroom vs. v7x's 64 MiB physical VMEM


def _layernorm_f32(y, gamma, beta):
    mu = jnp.mean(y, axis=-1, keepdims=True)
    var = jnp.mean((y - mu) * (y - mu), axis=-1, keepdims=True)
    return (y - mu) * lax.rsqrt(var + _LN_EPS) * gamma + beta


# ---------------------------------------------------------------------------
# Kernel 1/2: fused multi-head attention block (per batch element)
# ---------------------------------------------------------------------------

def _mha_res_ln_kernel(q_in_ref, kv_in_ref, mask_ref,
                       wq_ref, bq_ref, wkv_ref, bkv_ref, wo_ref, bo_ref,
                       g_ref, b_ref, o_ref, *, n_heads):
    """QKV projection -> per-head softmax(QK^T/sqrt(dh), masked) V -> output projection
    -> residual add -> LayerNorm, all on one (Sq, D) lane-dense slab per batch element."""
    x_q = q_in_ref[0].astype(jnp.float32)      # (Sq, D); also the residual input
    x_kv = kv_in_ref[0].astype(jnp.float32)    # (Sk, D)
    mask = mask_ref[0]                         # (Sq, Sk); 1 = attend, 0 = masked

    sq, d = x_q.shape
    dh = d // n_heads
    scale = dh ** -0.5

    # Fused projections (bf16 MXU operands, f32 accumulation). K|V weights are concatenated.
    q = jnp.dot(x_q.astype(jnp.bfloat16), wq_ref[...],
                preferred_element_type=jnp.float32) + bq_ref[...]            # (Sq, D)
    kv = jnp.dot(x_kv.astype(jnp.bfloat16), wkv_ref[...],
                 preferred_element_type=jnp.float32) + bkv_ref[...]          # (Sk, 2D)
    k = kv[:, :d]
    v = kv[:, d:]

    wo = wo_ref[...]                                                         # (D, D) f32
    acc = jnp.zeros((sq, d), jnp.float32)
    # TODO(synk): for long sequences convert this to a flash-style online-softmax loop over
    #             Sk tiles instead of materializing the full (Sq, Sk) score matrix per head.
    for h in range(n_heads):
        cs = slice(h * dh, (h + 1) * dh)
        qh = q[:, cs].astype(jnp.bfloat16)                                   # (Sq, dh)
        kh = k[:, cs].astype(jnp.bfloat16)                                   # (Sk, dh)
        vh = v[:, cs].astype(jnp.bfloat16)                                   # (Sk, dh)
        s = lax.dot_general(qh, kh, (((1,), (1,)), ((), ())),
                            preferred_element_type=jnp.float32) * scale      # (Sq, Sk)
        s = jnp.where(mask > 0, s, -1e9)                                     # same mask for all heads
        s = s - jnp.max(s, axis=-1, keepdims=True)
        p = jnp.exp(s)
        p = p * pl.reciprocal(jnp.sum(p, axis=-1, keepdims=True), approx=True)
        oh = jnp.dot(p.astype(jnp.bfloat16), vh,
                     preferred_element_type=jnp.float32)                     # (Sq, dh)
        # Output projection decomposed per head:  concat_h(o_h) @ Wo == sum_h o_h @ Wo[rows_h]
        acc = acc + jnp.dot(oh.astype(jnp.bfloat16), wo[cs, :].astype(jnp.bfloat16),
                            preferred_element_type=jnp.float32)              # (Sq, D)
    proj = acc + bo_ref[...]

    y = x_q + proj                                   # dropout == identity (eval mode)
    o_ref[0] = _layernorm_f32(y, g_ref[...], b_ref[...]).astype(o_ref.dtype)


def fused_mha_res_ln(p, gamma, beta, q_in, kv_in, mask, n_heads):
    """q_in: (B, Sq, D) (also the residual), kv_in: (B, Sk, D), mask: (B, Sq, Sk) {0,1}."""
    B, Sq, D = q_in.shape
    Sk = kv_in.shape[1]

    wq = p["wq"].astype(jnp.bfloat16)
    wkv = jnp.concatenate([p["wk"], p["wv"]], axis=1).astype(jnp.bfloat16)    # (D, 2D)
    bq = p["bq"].reshape(1, D)
    bkv = jnp.concatenate([p["bk"], p["bv"]]).reshape(1, 2 * D)
    wo = p["wo"]                                                              # f32 (sliced per head)
    bo = p["bo"].reshape(1, D)

    kernel = functools.partial(_mha_res_ln_kernel, n_heads=n_heads)
    return pl.pallas_call(
        kernel,
        out_shape=jax.ShapeDtypeStruct((B, Sq, D), q_in.dtype),
        grid=(B,),
        in_specs=[
            pl.BlockSpec((1, Sq, D), lambda b: (b, 0, 0)),      # q source / residual
            pl.BlockSpec((1, Sk, D), lambda b: (b, 0, 0)),      # kv source
            pl.BlockSpec((1, Sq, Sk), lambda b: (b, 0, 0)),     # per-batch mask (heads in-kernel)
            pl.BlockSpec((D, D), lambda b: (0, 0)),             # wq   (resident across grid)
            pl.BlockSpec((1, D), lambda b: (0, 0)),             # bq
            pl.BlockSpec((D, 2 * D), lambda b: (0, 0)),         # wk|wv fused
            pl.BlockSpec((1, 2 * D), lambda b: (0, 0)),         # bk|bv fused
            pl.BlockSpec((D, D), lambda b: (0, 0)),             # wo
            pl.BlockSpec((1, D), lambda b: (0, 0)),             # bo
            pl.BlockSpec((1, D), lambda b: (0, 0)),             # LN gamma
            pl.BlockSpec((1, D), lambda b: (0, 0)),             # LN beta
        ],
        out_specs=pl.BlockSpec((1, Sq, D), lambda b: (b, 0, 0)),
        compiler_params=pltpu.CompilerParams(
            dimension_semantics=("parallel",),
            vmem_limit_bytes=_VMEM_LIMIT),
    )(q_in, kv_in, mask.astype(jnp.float32),
      wq, bq, wkv, bkv, wo, bo, gamma.reshape(1, D), beta.reshape(1, D))


# ---------------------------------------------------------------------------
# Kernel 3: fused conv-FFN + residual + LayerNorm (tiled over M = B*S rows)
# ---------------------------------------------------------------------------

def _ffn_res_ln_kernel(x_ref, w1_ref, b1_ref, w2_ref, b2_ref, g_ref, b_ref, o_ref):
    x = x_ref[...].astype(jnp.float32)                                        # (tm, D)
    h = jnp.dot(x.astype(jnp.bfloat16), w1_ref[...],
                preferred_element_type=jnp.float32) + b1_ref[...]             # (tm, F)
    h = jnp.maximum(h, 0.0)                                                   # activation = relu
    f = jnp.dot(h.astype(jnp.bfloat16), w2_ref[...],
                preferred_element_type=jnp.float32) + b2_ref[...]             # (tm, D)
    y = x + f                                                                 # dropout == identity
    o_ref[...] = _layernorm_f32(y, g_ref[...], b_ref[...]).astype(o_ref.dtype)


def _row_tile(m):
    """Row tile for the M=B*S grid: big enough to amortize per-step overhead, small enough
    to give >=2 'parallel' blocks for megacore sharding when m allows it."""
    if m <= 8 or m % 8 != 0:
        return m
    half = (m // 2) // 8 * 8
    return min(256, max(8, half))


def fused_ffn_res_ln(params, y):
    B, S, D = y.shape
    M = B * S
    F = params["ffn_w1"].shape[1]
    tm = _row_tile(M)

    x2 = y.reshape(M, D)
    w1 = params["ffn_w1"].astype(jnp.bfloat16)
    w2 = params["ffn_w2"].astype(jnp.bfloat16)
    # TODO(synk): for very large d_ff on v7x (64 MiB VMEM), K-tile d_ff with an acc scratch
    #             and pl.when init/finalize instead of holding full (D,F)/(F,D) weight blocks.
    out = pl.pallas_call(
        _ffn_res_ln_kernel,
        out_shape=jax.ShapeDtypeStruct((M, D), y.dtype),
        grid=(pl.cdiv(M, tm),),
        in_specs=[
            pl.BlockSpec((tm, D), lambda i: (i, 0)),            # activation tile / residual
            pl.BlockSpec((D, F), lambda i: (0, 0)),             # w1 (resident)
            pl.BlockSpec((1, F), lambda i: (0, 0)),             # b1
            pl.BlockSpec((F, D), lambda i: (0, 0)),             # w2 (resident)
            pl.BlockSpec((1, D), lambda i: (0, 0)),             # b2
            pl.BlockSpec((1, D), lambda i: (0, 0)),             # LN gamma
            pl.BlockSpec((1, D), lambda i: (0, 0)),             # LN beta
        ],
        out_specs=pl.BlockSpec((tm, D), lambda i: (i, 0)),
        compiler_params=pltpu.CompilerParams(
            dimension_semantics=("parallel",),
            vmem_limit_bytes=_VMEM_LIMIT),
    )(x2, w1, params["ffn_b1"].reshape(1, F), w2, params["ffn_b2"].reshape(1, D),
      params["ln3_g"].reshape(1, D), params["ln3_b"].reshape(1, D))
    return out.reshape(B, S, D)


# ---------------------------------------------------------------------------
# DecoderLayer forward: exactly 3 pallas_calls
# ---------------------------------------------------------------------------

def decoder_layer(params, y, encoder_result, look_ahead_mask, encoder_decoder_mask, n_heads):
    """y: (B, S, D), encoder_result: (B, S_enc, D),
       look_ahead_mask: (B, S, S), encoder_decoder_mask: (B, S, S_enc)."""
    # masked self-attention + residual + norm1
    y = fused_mha_res_ln(params["mha1"], params["ln1_g"], params["ln1_b"],
                         y, y, look_ahead_mask, n_heads)
    # cross-attention + residual + norm2
    y = fused_mha_res_ln(params["mha2"], params["ln2_g"], params["ln2_b"],
                         y, encoder_result, encoder_decoder_mask, n_heads)
    # conv feed-forward (Conv1d k=1 == per-position linear) + residual + norm3
    y = fused_ffn_res_ln(params, y)
    return y


# ---------------------------------------------------------------------------
# Deterministic parameter construction
# ---------------------------------------------------------------------------

def make_params(key, d_model, d_ff):
    keys = jax.random.split(key, 16)

    def w(k, shape, scale=0.05):
        return jax.random.normal(k, shape, jnp.float32) * scale

    def mha_params(k):
        ks = jax.random.split(k, 4)
        return {
            "wq": w(ks[0], (d_model, d_model)), "bq": jnp.zeros((d_model,), jnp.float32),
            "wk": w(ks[1], (d_model, d_model)), "bk": jnp.zeros((d_model,), jnp.float32),
            "wv": w(ks[2], (d_model, d_model)), "bv": jnp.zeros((d_model,), jnp.float32),
            "wo": w(ks[3], (d_model, d_model)), "bo": jnp.zeros((d_model,), jnp.float32),
        }

    return {
        "mha1": mha_params(keys[0]),
        "mha2": mha_params(keys[1]),
        "ffn_w1": w(keys[2], (d_model, d_ff)),
        "ffn_b1": jnp.zeros((d_ff,), jnp.float32),
        "ffn_w2": w(keys[3], (d_ff, d_model)),
        "ffn_b2": jnp.zeros((d_model,), jnp.float32),
        "ln1_g": jnp.ones((d_model,), jnp.float32),
        "ln1_b": jnp.zeros((d_model,), jnp.float32),
        "ln2_g": jnp.ones((d_model,), jnp.float32),
        "ln2_b": jnp.zeros((d_model,), jnp.float32),
        "ln3_g": jnp.ones((d_model,), jnp.float32),
        "ln3_b": jnp.zeros((d_model,), jnp.float32),
    }


# ---------------------------------------------------------------------------
# Main
# ---------------------------------------------------------------------------

if __name__ == "__main__":
    B, S, S_enc = 2, 8, 8
    d_model, d_ff, n_heads = 32, 64, 4

    key = jax.random.PRNGKey(0)
    k_p, k_y, k_e = jax.random.split(key, 3)

    params = make_params(k_p, d_model, d_ff)
    y = jax.random.normal(k_y, (B, S, d_model), jnp.float32)
    enc = jax.random.normal(k_e, (B, S_enc, d_model), jnp.float32)

    # look-ahead (causal) mask: 1 = attend, 0 = masked
    look_ahead_mask = jnp.broadcast_to(
        jnp.tril(jnp.ones((S, S), jnp.float32)), (B, S, S))
    # encoder-decoder mask: attend to everything
    encoder_decoder_mask = jnp.ones((B, S, S_enc), jnp.float32)

    fwd = jax.jit(functools.partial(decoder_layer, n_heads=n_heads))
    out = fwd(params, y, enc, look_ahead_mask, encoder_decoder_mask)
    jax.block_until_ready(out)

    assert out.shape == (B, S, d_model) and out.dtype == jnp.float32
    print("KERNEL_OK")
</pallas_src>

<mosaic_0001>
module attributes {stable_mosaic.version = 11 : i64} {
  func.func @_mha_res_ln_kernel(%arg0: i32, %arg1: memref<1x8x32xf32, #tpu.memory_space<vmem>>, %arg2: memref<1x8x32xf32, #tpu.memory_space<vmem>>, %arg3: memref<1x8x8xf32, #tpu.memory_space<vmem>>, %arg4: memref<32x32xbf16, #tpu.memory_space<vmem>>, %arg5: memref<1x32xf32, #tpu.memory_space<vmem>>, %arg6: memref<32x64xbf16, #tpu.memory_space<vmem>>, %arg7: memref<1x64xf32, #tpu.memory_space<vmem>>, %arg8: memref<32x32xf32, #tpu.memory_space<vmem>>, %arg9: memref<1x32xf32, #tpu.memory_space<vmem>>, %arg10: memref<1x32xf32, #tpu.memory_space<vmem>>, %arg11: memref<1x32xf32, #tpu.memory_space<vmem>>, %arg12: memref<1x8x32xf32, #tpu.memory_space<vmem>>) attributes {dimension_semantics = [#tpu.dimension_semantics<parallel>], iteration_bounds = array<i64: 2>, scalar_prefetch = 0 : i64, scratch_operands = 0 : i64, tpu.core_type = #tpu.core_type<tc>, window_params = [{transform_indices = @transform_0, window_bounds = array<i64: 1, 8, 32>}, {transform_indices = @transform_1, window_bounds = array<i64: 1, 8, 32>}, {transform_indices = @transform_2, window_bounds = array<i64: 1, 8, 8>}, {pipeline_mode = #tpu.pipeline_mode<synchronous>, transform_indices = @transform_3, window_bounds = array<i64: 32, 32>}, {pipeline_mode = #tpu.pipeline_mode<synchronous>, transform_indices = @transform_4, window_bounds = array<i64: 1, 32>}, {pipeline_mode = #tpu.pipeline_mode<synchronous>, transform_indices = @transform_5, window_bounds = array<i64: 32, 64>}, {pipeline_mode = #tpu.pipeline_mode<synchronous>, transform_indices = @transform_6, window_bounds = array<i64: 1, 64>}, {pipeline_mode = #tpu.pipeline_mode<synchronous>, transform_indices = @transform_7, window_bounds = array<i64: 32, 32>}, {pipeline_mode = #tpu.pipeline_mode<synchronous>, transform_indices = @transform_8, window_bounds = array<i64: 1, 32>}, {pipeline_mode = #tpu.pipeline_mode<synchronous>, transform_indices = @transform_9, window_bounds = array<i64: 1, 32>}, {pipeline_mode = #tpu.pipeline_mode<synchronous>, transform_indices = @transform_10, window_bounds = array<i64: 1, 32>}, {transform_indices = @transform_11, window_bounds = array<i64: 1, 8, 32>}]} {
    %c0 = arith.constant 0 : index
    %c0_0 = arith.constant 0 : index
    %c0_1 = arith.constant 0 : index
    %0 = vector.load %arg1[%c0, %c0_0, %c0_1] : memref<1x8x32xf32, #tpu.memory_space<vmem>>, vector<1x8x32xf32>
    %1 = vector.shape_cast %0 : vector<1x8x32xf32> to vector<8x32xf32>
    %c0_2 = arith.constant 0 : index
    %c0_3 = arith.constant 0 : index
    %c0_4 = arith.constant 0 : index
    %2 = vector.load %arg2[%c0_2, %c0_3, %c0_4] : memref<1x8x32xf32, #tpu.memory_space<vmem>>, vector<1x8x32xf32>
    %3 = vector.shape_cast %2 : vector<1x8x32xf32> to vector<8x32xf32>
    %c0_5 = arith.constant 0 : index
    %c0_6 = arith.constant 0 : index
    %c0_7 = arith.constant 0 : index
    %4 = vector.load %arg3[%c0_5, %c0_6, %c0_7] : memref<1x8x8xf32, #tpu.memory_space<vmem>>, vector<1x8x8xf32>
    %5 = vector.shape_cast %4 : vector<1x8x8xf32> to vector<8x8xf32>
    %6 = arith.truncf %1 : vector<8x32xf32> to vector<8x32xbf16>
    %c0_8 = arith.constant 0 : index
    %c0_9 = arith.constant 0 : index
    %7 = vector.load %arg4[%c0_8, %c0_9] : memref<32x32xbf16, #tpu.memory_space<vmem>>, vector<32x32xbf16>
    %cst = arith.constant dense<0.000000e+00> : vector<8x32xf32>
    %8 = tpu.matmul %6, %7, %cst {dimension_numbers = #tpu.dot_dimension_numbers<[1], [0], [0], [1], [0, 0, 1, 1], [], []>} : vector<8x32xbf16>, vector<32x32xbf16>, vector<8x32xf32> -> vector<8x32xf32>
    %c0_10 = arith.constant 0 : index
    %c0_11 = arith.constant 0 : index
    %9 = vector.load %arg5[%c0_10, %c0_11] : memref<1x32xf32, #tpu.memory_space<vmem>>, vector<1x32xf32>
    %10 = vector.broadcast %9 : vector<1x32xf32> to vector<8x32xf32>
    %11 = arith.addf %8, %10 : vector<8x32xf32>
    %12 = arith.truncf %3 : vector<8x32xf32> to vector<8x32xbf16>
    %c0_12 = arith.constant 0 : index
    %c0_13 = arith.constant 0 : index
    %13 = vector.load %arg6[%c0_12, %c0_13] : memref<32x64xbf16, #tpu.memory_space<vmem>>, vector<32x64xbf16>
    %cst_14 = arith.constant dense<0.000000e+00> : vector<8x64xf32>
    %14 = tpu.matmul %12, %13, %cst_14 {dimension_numbers = #tpu.dot_dimension_numbers<[1], [0], [0], [1], [0, 0, 1, 1], [], []>} : vector<8x32xbf16>, vector<32x64xbf16>, vector<8x64xf32> -> vector<8x64xf32>
    %c0_15 = arith.constant 0 : index
    %c0_16 = arith.constant 0 : index
    %15 = vector.load %arg7[%c0_15, %c0_16] : memref<1x64xf32, #tpu.memory_space<vmem>>, vector<1x64xf32>
    %16 = vector.broadcast %15 : vector<1x64xf32> to vector<8x64xf32>
    %17 = arith.addf %14, %16 : vector<8x64xf32>
    %18 = vector.extract_strided_slice %17 {offsets = [0, 0], sizes = [8, 32], strides = [1, 1]} : vector<8x64xf32> to vector<8x32xf32>
    %19 = vector.extract_strided_slice %17 {offsets = [0, 32], sizes = [8, 32], strides = [1, 1]} : vector<8x64xf32> to vector<8x32xf32>
    %c0_17 = arith.constant 0 : index
    %c0_18 = arith.constant 0 : index
    %20 = vector.load %arg8[%c0_17, %c0_18] : memref<32x32xf32, #tpu.memory_space<vmem>>, vector<32x32xf32>
    %cst_19 = arith.constant 0.000000e+00 : f32
    %21 = vector.broadcast %cst_19 : f32 to vector<8x32xf32>
    %22 = vector.extract_strided_slice %11 {offsets = [0, 0], sizes = [8, 8], strides = [1, 1]} : vector<8x32xf32> to vector<8x8xf32>
    %23 = arith.truncf %22 : vector<8x8xf32> to vector<8x8xbf16>
    %24 = vector.extract_strided_slice %18 {offsets = [0, 0], sizes = [8, 8], strides = [1, 1]} : vector<8x32xf32> to vector<8x8xf32>
    %25 = arith.truncf %24 : vector<8x8xf32> to vector<8x8xbf16>
    %26 = vector.extract_strided_slice %19 {offsets = [0, 0], sizes = [8, 8], strides = [1, 1]} : vector<8x32xf32> to vector<8x8xf32>
    %27 = arith.truncf %26 : vector<8x8xf32> to vector<8x8xbf16>
    %cst_20 = arith.constant dense<0.000000e+00> : vector<8x8xf32>
    %28 = tpu.matmul %23, %25, %cst_20 {dimension_numbers = #tpu.dot_dimension_numbers<[1], [1], [0], [0], [0, 0, 1, 0], [], []>} : vector<8x8xbf16>, vector<8x8xbf16>, vector<8x8xf32> -> vector<8x8xf32>
    %cst_21 = arith.constant 0.353553385 : f32
    %29 = vector.broadcast %cst_21 : f32 to vector<8x8xf32>
    %30 = arith.mulf %28, %29 : vector<8x8xf32>
    %cst_22 = arith.constant 0.000000e+00 : f32
    %31 = vector.broadcast %cst_22 : f32 to vector<8x8xf32>
    %32 = arith.cmpf ogt, %5, %31 : vector<8x8xf32>
    %cst_23 = arith.constant -1.000000e+09 : f32
    %33 = vector.broadcast %cst_23 : f32 to vector<8x8xf32>
    %34 = arith.select %32, %30, %33 : vector<8x8xi1>, vector<8x8xf32>
    %cst_24 = arith.constant dense<0xFF800000> : vector<8xf32>
    %35 = vector.multi_reduction <maximumf>, %34, %cst_24 [1] : vector<8x8xf32> to vector<8xf32>
    %36 = vector.shape_cast %35 : vector<8xf32> to vector<8x1xf32>
    %37 = vector.broadcast %36 : vector<8x1xf32> to vector<8x8xf32>
    %38 = arith.subf %34, %37 : vector<8x8xf32>
    %39 = math.exp %38 : vector<8x8xf32>
    %cst_25 = arith.constant dense<0.000000e+00> : vector<8xf32>
    %40 = vector.multi_reduction <add>, %39, %cst_25 [1] : vector<8x8xf32> to vector<8xf32>
    %41 = vector.shape_cast %40 : vector<8xf32> to vector<8x1xf32>
    %42 = tpu.reciprocal %41 {approx = true} : vector<8x1xf32> -> vector<8x1xf32>
    %43 = vector.broadcast %42 : vector<8x1xf32> to vector<8x8xf32>
    %44 = arith.mulf %39, %43 : vector<8x8xf32>
    %45 = arith.truncf %44 : vector<8x8xf32> to vector<8x8xbf16>
    %cst_26 = arith.constant dense<0.000000e+00> : vector<8x8xf32>
    %46 = tpu.matmul %45, %27, %cst_26 {dimension_numbers = #tpu.dot_dimension_numbers<[1], [0], [0], [1], [0, 0, 1, 1], [], []>} : vector<8x8xbf16>, vector<8x8xbf16>, vector<8x8xf32> -> vector<8x8xf32>
    %47 = arith.truncf %46 : vector<8x8xf32> to vector<8x8xbf16>
    %48 = vector.extract_strided_slice %20 {offsets = [0, 0], sizes = [8, 32], strides = [1, 1]} : vector<32x32xf32> to vector<8x32xf32>
    %49 = arith.truncf %48 : vector<8x32xf32> to vector<8x32xbf16>
    %cst_27 = arith.constant dense<0.000000e+00> : vector<8x32xf32>
    %50 = tpu.matmul %47, %49, %cst_27 {dimension_numbers = #tpu.dot_dimension_numbers<[1], [0], [0], [1], [0, 0, 1, 1], [], []>} : vector<8x8xbf16>, vector<8x32xbf16>, vector<8x32xf32> -> vector<8x32xf32>
    %51 = arith.addf %21, %50 : vector<8x32xf32>
    %52 = vector.extract_strided_slice %11 {offsets = [0, 8], sizes = [8, 8], strides = [1, 1]} : vector<8x32xf32> to vector<8x8xf32>
    %53 = arith.truncf %52 : vector<8x8xf32> to vector<8x8xbf16>
    %54 = vector.extract_strided_slice %18 {offsets = [0, 8], sizes = [8, 8], strides = [1, 1]} : vector<8x32xf32> to vector<8x8xf32>
    %55 = arith.truncf %54 : vector<8x8xf32> to vector<8x8xbf16>
    %56 = vector.extract_strided_slice %19 {offsets = [0, 8], sizes = [8, 8], strides = [1, 1]} : vector<8x32xf32> to vector<8x8xf32>
    %57 = arith.truncf %56 : vector<8x8xf32> to vector<8x8xbf16>
    %cst_28 = arith.constant dense<0.000000e+00> : vector<8x8xf32>
    %58 = tpu.matmul %53, %55, %cst_28 {dimension_numbers = #tpu.dot_dimension_numbers<[1], [1], [0], [0], [0, 0, 1, 0], [], []>} : vector<8x8xbf16>, vector<8x8xbf16>, vector<8x8xf32> -> vector<8x8xf32>
    %cst_29 = arith.constant 0.353553385 : f32
    %59 = vector.broadcast %cst_29 : f32 to vector<8x8xf32>
    %60 = arith.mulf %58, %59 : vector<8x8xf32>
    %cst_30 = arith.constant 0.000000e+00 : f32
    %61 = vector.broadcast %cst_30 : f32 to vector<8x8xf32>
    %62 = arith.cmpf ogt, %5, %61 : vector<8x8xf32>
    %cst_31 = arith.constant -1.000000e+09 : f32
    %63 = vector.broadcast %cst_31 : f32 to vector<8x8xf32>
    %64 = arith.select %62, %60, %63 : vector<8x8xi1>, vector<8x8xf32>
    %cst_32 = arith.constant dense<0xFF800000> : vector<8xf32>
    %65 = vector.multi_reduction <maximumf>, %64, %cst_32 [1] : vector<8x8xf32> to vector<8xf32>
    %66 = vector.shape_cast %65 : vector<8xf32> to vector<8x1xf32>
    %67 = vector.broadcast %66 : vector<8x1xf32> to vector<8x8xf32>
    %68 = arith.subf %64, %67 : vector<8x8xf32>
    %69 = math.exp %68 : vector<8x8xf32>
    %cst_33 = arith.constant dense<0.000000e+00> : vector<8xf32>
    %70 = vector.multi_reduction <add>, %69, %cst_33 [1] : vector<8x8xf32> to vector<8xf32>
    %71 = vector.shape_cast %70 : vector<8xf32> to vector<8x1xf32>
    %72 = tpu.reciprocal %71 {approx = true} : vector<8x1xf32> -> vector<8x1xf32>
    %73 = vector.broadcast %72 : vector<8x1xf32> to vector<8x8xf32>
    %74 = arith.mulf %69, %73 : vector<8x8xf32>
    %75 = arith.truncf %74 : vector<8x8xf32> to vector<8x8xbf16>
    %cst_34 = arith.constant dense<0.000000e+00> : vector<8x8xf32>
    %76 = tpu.matmul %75, %57, %cst_34 {dimension_numbers = #tpu.dot_dimension_numbers<[1], [0], [0], [1], [0, 0, 1, 1], [], []>} : vector<8x8xbf16>, vector<8x8xbf16>, vector<8x8xf32> -> vector<8x8xf32>
    %77 = arith.truncf %76 : vector<8x8xf32> to vector<8x8xbf16>
    %78 = vector.extract_strided_slice %20 {offsets = [8, 0], sizes = [8, 32], strides = [1, 1]} : vector<32x32xf32> to vector<8x32xf32>
    %79 = arith.truncf %78 : vector<8x32xf32> to vector<8x32xbf16>
    %cst_35 = arith.constant dense<0.000000e+00> : vector<8x32xf32>
    %80 = tpu.matmul %77, %79, %cst_35 {dimension_numbers = #tpu.dot_dimension_numbers<[1], [0], [0], [1], [0, 0, 1, 1], [], []>} : vector<8x8xbf16>, vector<8x32xbf16>, vector<8x32xf32> -> vector<8x32xf32>
    %81 = arith.addf %51, %80 : vector<8x32xf32>
    %82 = vector.extract_strided_slice %11 {offsets = [0, 16], sizes = [8, 8], strides = [1, 1]} : vector<8x32xf32> to vector<8x8xf32>
    %83 = arith.truncf %82 : vector<8x8xf32> to vector<8x8xbf16>
    %84 = vector.extract_strided_slice %18 {offsets = [0, 16], sizes = [8, 8], strides = [1, 1]} : vector<8x32xf32> to vector<8x8xf32>
    %85 = arith.truncf %84 : vector<8x8xf32> to vector<8x8xbf16>
    %86 = vector.extract_strided_slice %19 {offsets = [0, 16], sizes = [8, 8], strides = [1, 1]} : vector<8x32xf32> to vector<8x8xf32>
    %87 = arith.truncf %86 : vector<8x8xf32> to vector<8x8xbf16>
    %cst_36 = arith.constant dense<0.000000e+00> : vector<8x8xf32>
    %88 = tpu.matmul %83, %85, %cst_36 {dimension_numbers = #tpu.dot_dimension_numbers<[1], [1], [0], [0], [0, 0, 1, 0], [], []>} : vector<8x8xbf16>, vector<8x8xbf16>, vector<8x8xf32> -> vector<8x8xf32>
    %cst_37 = arith.constant 0.353553385 : f32
    %89 = vector.broadcast %cst_37 : f32 to vector<8x8xf32>
    %90 = arith.mulf %88, %89 : vector<8x8xf32>
    %cst_38 = arith.constant 0.000000e+00 : f32
    %91 = vector.broadcast %cst_38 : f32 to vector<8x8xf32>
    %92 = arith.cmpf ogt, %5, %91 : vector<8x8xf32>
    %cst_39 = arith.constant -1.000000e+09 : f32
    %93 = vector.broadcast %cst_39 : f32 to vector<8x8xf32>
    %94 = arith.select %92, %90, %93 : vector<8x8xi1>, vector<8x8xf32>
    %cst_40 = arith.constant dense<0xFF800000> : vector<8xf32>
    %95 = vector.multi_reduction <maximumf>, %94, %cst_40 [1] : vector<8x8xf32> to vector<8xf32>
    %96 = vector.shape_cast %95 : vector<8xf32> to vector<8x1xf32>
    %97 = vector.broadcast %96 : vector<8x1xf32> to vector<8x8xf32>
    %98 = arith.subf %94, %97 : vector<8x8xf32>
    %99 = math.exp %98 : vector<8x8xf32>
    %cst_41 = arith.constant dense<0.000000e+00> : vector<8xf32>
    %100 = vector.multi_reduction <add>, %99, %cst_41 [1] : vector<8x8xf32> to vector<8xf32>
    %101 = vector.shape_cast %100 : vector<8xf32> to vector<8x1xf32>
    %102 = tpu.reciprocal %101 {approx = true} : vector<8x1xf32> -> vector<8x1xf32>
    %103 = vector.broadcast %102 : vector<8x1xf32> to vector<8x8xf32>
    %104 = arith.mulf %99, %103 : vector<8x8xf32>
    %105 = arith.truncf %104 : vector<8x8xf32> to vector<8x8xbf16>
    %cst_42 = arith.constant dense<0.000000e+00> : vector<8x8xf32>
    %106 = tpu.matmul %105, %87, %cst_42 {dimension_numbers = #tpu.dot_dimension_numbers<[1], [0], [0], [1], [0, 0, 1, 1], [], []>} : vector<8x8xbf16>, vector<8x8xbf16>, vector<8x8xf32> -> vector<8x8xf32>
    %107 = arith.truncf %106 : vector<8x8xf32> to vector<8x8xbf16>
    %108 = vector.extract_strided_slice %20 {offsets = [16, 0], sizes = [8, 32], strides = [1, 1]} : vector<32x32xf32> to vector<8x32xf32>
    %109 = arith.truncf %108 : vector<8x32xf32> to vector<8x32xbf16>
    %cst_43 = arith.constant dense<0.000000e+00> : vector<8x32xf32>
    %110 = tpu.matmul %107, %109, %cst_43 {dimension_numbers = #tpu.dot_dimension_numbers<[1], [0], [0], [1], [0, 0, 1, 1], [], []>} : vector<8x8xbf16>, vector<8x32xbf16>, vector<8x32xf32> -> vector<8x32xf32>
    %111 = arith.addf %81, %110 : vector<8x32xf32>
    %112 = vector.extract_strided_slice %11 {offsets = [0, 24], sizes = [8, 8], strides = [1, 1]} : vector<8x32xf32> to vector<8x8xf32>
    %113 = arith.truncf %112 : vector<8x8xf32> to vector<8x8xbf16>
    %114 = vector.extract_strided_slice %18 {offsets = [0, 24], sizes = [8, 8], strides = [1, 1]} : vector<8x32xf32> to vector<8x8xf32>
    %115 = arith.truncf %114 : vector<8x8xf32> to vector<8x8xbf16>
    %116 = vector.extract_strided_slice %19 {offsets = [0, 24], sizes = [8, 8], strides = [1, 1]} : vector<8x32xf32> to vector<8x8xf32>
    %117 = arith.truncf %116 : vector<8x8xf32> to vector<8x8xbf16>
    %cst_44 = arith.constant dense<0.000000e+00> : vector<8x8xf32>
    %118 = tpu.matmul %113, %115, %cst_44 {dimension_numbers = #tpu.dot_dimension_numbers<[1], [1], [0], [0], [0, 0, 1, 0], [], []>} : vector<8x8xbf16>, vector<8x8xbf16>, vector<8x8xf32> -> vector<8x8xf32>
    %cst_45 = arith.constant 0.353553385 : f32
    %119 = vector.broadcast %cst_45 : f32 to vector<8x8xf32>
    %120 = arith.mulf %118, %119 : vector<8x8xf32>
    %cst_46 = arith.constant 0.000000e+00 : f32
    %121 = vector.broadcast %cst_46 : f32 to vector<8x8xf32>
    %122 = arith.cmpf ogt, %5, %121 : vector<8x8xf32>
    %cst_47 = arith.constant -1.000000e+09 : f32
    %123 = vector.broadcast %cst_47 : f32 to vector<8x8xf32>
    %124 = arith.select %122, %120, %123 : vector<8x8xi1>, vector<8x8xf32>
    %cst_48 = arith.constant dense<0xFF800000> : vector<8xf32>
    %125 = vector.multi_reduction <maximumf>, %124, %cst_48 [1] : vector<8x8xf32> to vector<8xf32>
    %126 = vector.shape_cast %125 : vector<8xf32> to vector<8x1xf32>
    %127 = vector.broadcast %126 : vector<8x1xf32> to vector<8x8xf32>
    %128 = arith.subf %124, %127 : vector<8x8xf32>
    %129 = math.exp %128 : vector<8x8xf32>
    %cst_49 = arith.constant dense<0.000000e+00> : vector<8xf32>
    %130 = vector.multi_reduction <add>, %129, %cst_49 [1] : vector<8x8xf32> to vector<8xf32>
    %131 = vector.shape_cast %130 : vector<8xf32> to vector<8x1xf32>
    %132 = tpu.reciprocal %131 {approx = true} : vector<8x1xf32> -> vector<8x1xf32>
    %133 = vector.broadcast %132 : vector<8x1xf32> to vector<8x8xf32>
    %134 = arith.mulf %129, %133 : vector<8x8xf32>
    %135 = arith.truncf %134 : vector<8x8xf32> to vector<8x8xbf16>
    %cst_50 = arith.constant dense<0.000000e+00> : vector<8x8xf32>
    %136 = tpu.matmul %135, %117, %cst_50 {dimension_numbers = #tpu.dot_dimension_numbers<[1], [0], [0], [1], [0, 0, 1, 1], [], []>} : vector<8x8xbf16>, vector<8x8xbf16>, vector<8x8xf32> -> vector<8x8xf32>
    %137 = arith.truncf %136 : vector<8x8xf32> to vector<8x8xbf16>
    %138 = vector.extract_strided_slice %20 {offsets = [24, 0], sizes = [8, 32], strides = [1, 1]} : vector<32x32xf32> to vector<8x32xf32>
    %139 = arith.truncf %138 : vector<8x32xf32> to vector<8x32xbf16>
    %cst_51 = arith.constant dense<0.000000e+00> : vector<8x32xf32>
    %140 = tpu.matmul %137, %139, %cst_51 {dimension_numbers = #tpu.dot_dimension_numbers<[1], [0], [0], [1], [0, 0, 1, 1], [], []>} : vector<8x8xbf16>, vector<8x32xbf16>, vector<8x32xf32> -> vector<8x32xf32>
    %141 = arith.addf %111, %140 : vector<8x32xf32>
    %c0_52 = arith.constant 0 : index
    %c0_53 = arith.constant 0 : index
    %142 = vector.load %arg9[%c0_52, %c0_53] : memref<1x32xf32, #tpu.memory_space<vmem>>, vector<1x32xf32>
    %143 = vector.broadcast %142 : vector<1x32xf32> to vector<8x32xf32>
    %144 = arith.addf %141, %143 : vector<8x32xf32>
    %145 = arith.addf %1, %144 : vector<8x32xf32>
    %c0_54 = arith.constant 0 : index
    %c0_55 = arith.constant 0 : index
    %146 = vector.load %arg10[%c0_54, %c0_55] : memref<1x32xf32, #tpu.memory_space<vmem>>, vector<1x32xf32>
    %c0_56 = arith.constant 0 : index
    %c0_57 = arith.constant 0 : index
    %147 = vector.load %arg11[%c0_56, %c0_57] : memref<1x32xf32, #tpu.memory_space<vmem>>, vector<1x32xf32>
    %cst_58 = arith.constant dense<0.000000e+00> : vector<8xf32>
    %148 = vector.multi_reduction <add>, %145, %cst_58 [1] : vector<8x32xf32> to vector<8xf32>
    %149 = vector.shape_cast %148 : vector<8xf32> to vector<8x1xf32>
    %cst_59 = arith.constant 3.200000e+01 : f32
    %150 = vector.broadcast %cst_59 : f32 to vector<8x1xf32>
    %151 = arith.divf %149, %150 : vector<8x1xf32>
    %152 = vector.broadcast %151 : vector<8x1xf32> to vector<8x32xf32>
    %153 = arith.subf %145, %152 : vector<8x32xf32>
    %154 = vector.broadcast %151 : vector<8x1xf32> to vector<8x32xf32>
    %155 = arith.subf %145, %154 : vector<8x32xf32>
    %156 = arith.mulf %153, %155 : vector<8x32xf32>
    %cst_60 = arith.constant dense<0.000000e+00> : vector<8xf32>
    %157 = vector.multi_reduction <add>, %156, %cst_60 [1] : vector<8x32xf32> to vector<8xf32>
    %158 = vector.shape_cast %157 : vector<8xf32> to vector<8x1xf32>
    %cst_61 = arith.constant 3.200000e+01 : f32
    %159 = vector.broadcast %cst_61 : f32 to vector<8x1xf32>
    %160 = arith.divf %158, %159 : vector<8x1xf32>
    %161 = vector.broadcast %151 : vector<8x1xf32> to vector<8x32xf32>
    %162 = arith.subf %145, %161 : vector<8x32xf32>
    %cst_62 = arith.constant 9.99999974E-6 : f32
    %163 = vector.broadcast %cst_62 : f32 to vector<8x1xf32>
    %164 = arith.addf %160, %163 : vector<8x1xf32>
    %165 = math.rsqrt %164 : vector<8x1xf32>
    %166 = vector.broadcast %165 : vector<8x1xf32> to vector<8x32xf32>
    %167 = arith.mulf %162, %166 : vector<8x32xf32>
    %168 = vector.broadcast %146 : vector<1x32xf32> to vector<8x32xf32>
    %169 = arith.mulf %167, %168 : vector<8x32xf32>
    %170 = vector.broadcast %147 : vector<1x32xf32> to vector<8x32xf32>
    %171 = arith.addf %169, %170 : vector<8x32xf32>
    %c0_63 = arith.constant 0 : index
    %c0_64 = arith.constant 0 : index
    %c0_65 = arith.constant 0 : index
    %172 = vector.load %arg12[%c0_63, %c0_64, %c0_65] : memref<1x8x32xf32, #tpu.memory_space<vmem>>, vector<1x8x32xf32>
    %173 = vector.shape_cast %172 : vector<1x8x32xf32> to vector<8x32xf32>
    %174 = vector.shape_cast %171 : vector<8x32xf32> to vector<1x8x32xf32>
    tpu.vector_store %arg12[%c0_63, %c0_64, %c0_65], %174 {strides = array<i32>} : memref<1x8x32xf32, #tpu.memory_space<vmem>>, vector<1x8x32xf32>,
    return
  }
  func.func @transform_0(%arg0: i32) -> (i32, i32, i32) {
    %c0_i32 = arith.constant 0 : i32
    %c0_i32_0 = arith.constant 0 : i32
    %c0_i32_1 = arith.constant 0 : i32
    return %arg0, %c0_i32, %c0_i32_0 : i32, i32, i32
  }
  func.func @transform_1(%arg0: i32) -> (i32, i32, i32) {
    %c0_i32 = arith.constant 0 : i32
    %c0_i32_0 = arith.constant 0 : i32
    %c0_i32_1 = arith.constant 0 : i32
    return %arg0, %c0_i32, %c0_i32_0 : i32, i32, i32
  }
  func.func @transform_2(%arg0: i32) -> (i32, i32, i32) {
    %c0_i32 = arith.constant 0 : i32
    %c0_i32_0 = arith.constant 0 : i32
    %c0_i32_1 = arith.constant 0 : i32
    return %arg0, %c0_i32, %c0_i32_0 : i32, i32, i32
  }
  func.func @transform_3(%arg0: i32) -> (i32, i32) {
    %c0_i32 = arith.constant 0 : i32
    %c0_i32_0 = arith.constant 0 : i32
    %c0_i32_1 = arith.constant 0 : i32
    return %c0_i32, %c0_i32_0 : i32, i32
  }
  func.func @transform_4(%arg0: i32) -> (i32, i32) {
    %c0_i32 = arith.constant 0 : i32
    %c0_i32_0 = arith.constant 0 : i32
    %c0_i32_1 = arith.constant 0 : i32
    return %c0_i32, %c0_i32_0 : i32, i32
  }
  func.func @transform_5(%arg0: i32) -> (i32, i32) {
    %c0_i32 = arith.constant 0 : i32
    %c0_i32_0 = arith.constant 0 : i32
    %c0_i32_1 = arith.constant 0 : i32
    return %c0_i32, %c0_i32_0 : i32, i32
  }
  func.func @transform_6(%arg0: i32) -> (i32, i32) {
    %c0_i32 = arith.constant 0 : i32
    %c0_i32_0 = arith.constant 0 : i32
    %c0_i32_1 = arith.constant 0 : i32
    return %c0_i32, %c0_i32_0 : i32, i32
  }
  func.func @transform_7(%arg0: i32) -> (i32, i32) {
    %c0_i32 = arith.constant 0 : i32
    %c0_i32_0 = arith.constant 0 : i32
    %c0_i32_1 = arith.constant 0 : i32
    return %c0_i32, %c0_i32_0 : i32, i32
  }
  func.func @transform_8(%arg0: i32) -> (i32, i32) {
    %c0_i32 = arith.constant 0 : i32
    %c0_i32_0 = arith.constant 0 : i32
    %c0_i32_1 = arith.constant 0 : i32
    return %c0_i32, %c0_i32_0 : i32, i32
  }
  func.func @transform_9(%arg0: i32) -> (i32, i32) {
    %c0_i32 = arith.constant 0 : i32
    %c0_i32_0 = arith.constant 0 : i32
    %c0_i32_1 = arith.constant 0 : i32
    return %c0_i32, %c0_i32_0 : i32, i32
  }
  func.func @transform_10(%arg0: i32) -> (i32, i32) {
    %c0_i32 = arith.constant 0 : i32
    %c0_i32_0 = arith.constant 0 : i32
    %c0_i32_1 = arith.constant 0 : i32
    return %c0_i32, %c0_i32_0 : i32, i32
  }
  func.func @transform_11(%arg0: i32) -> (i32, i32, i32) {
    %c0_i32 = arith.constant 0 : i32
    %c0_i32_0 = arith.constant 0 : i32
    %c0_i32_1 = arith.constant 0 : i32
    return %arg0, %c0_i32, %c0_i32_0 : i32, i32, i32
  }
}

module attributes {stable_mosaic.version = 11 : i64} {
  func.func @_ffn_res_ln_kernel(%arg0: i32, %arg1: memref<8x32xf32, #tpu.memory_space<vmem>>, %arg2: memref<32x64xbf16, #tpu.memory_space<vmem>>, %arg3: memref<1x64xf32, #tpu.memory_space<vmem>>, %arg4: memref<64x32xbf16, #tpu.memory_space<vmem>>, %arg5: memref<1x32xf32, #tpu.memory_space<vmem>>, %arg6: memref<1x32xf32, #tpu.memory_space<vmem>>, %arg7: memref<1x32xf32, #tpu.memory_space<vmem>>, %arg8: memref<8x32xf32, #tpu.memory_space<vmem>>) attributes {dimension_semantics = [#tpu.dimension_semantics<parallel>], iteration_bounds = array<i64: 2>, scalar_prefetch = 0 : i64, scratch_operands = 0 : i64, tpu.core_type = #tpu.core_type<tc>, window_params = [{transform_indices = @transform_0, window_bounds = array<i64: 8, 32>}, {pipeline_mode = #tpu.pipeline_mode<synchronous>, transform_indices = @transform_1, window_bounds = array<i64: 32, 64>}, {pipeline_mode = #tpu.pipeline_mode<synchronous>, transform_indices = @transform_2, window_bounds = array<i64: 1, 64>}, {pipeline_mode = #tpu.pipeline_mode<synchronous>, transform_indices = @transform_3, window_bounds = array<i64: 64, 32>}, {pipeline_mode = #tpu.pipeline_mode<synchronous>, transform_indices = @transform_4, window_bounds = array<i64: 1, 32>}, {pipeline_mode = #tpu.pipeline_mode<synchronous>, transform_indices = @transform_5, window_bounds = array<i64: 1, 32>}, {pipeline_mode = #tpu.pipeline_mode<synchronous>, transform_indices = @transform_6, window_bounds = array<i64: 1, 32>}, {transform_indices = @transform_7, window_bounds = array<i64: 8, 32>}]} {
    %c0 = arith.constant 0 : index
    %c0_0 = arith.constant 0 : index
    %0 = vector.load %arg1[%c0, %c0_0] : memref<8x32xf32, #tpu.memory_space<vmem>>, vector<8x32xf32>
    %1 = arith.truncf %0 : vector<8x32xf32> to vector<8x32xbf16>
    %c0_1 = arith.constant 0 : index
    %c0_2 = arith.constant 0 : index
    %2 = vector.load %arg2[%c0_1, %c0_2] : memref<32x64xbf16, #tpu.memory_space<vmem>>, vector<32x64xbf16>
    %cst = arith.constant dense<0.000000e+00> : vector<8x64xf32>
    %3 = tpu.matmul %1, %2, %cst {dimension_numbers = #tpu.dot_dimension_numbers<[1], [0], [0], [1], [0, 0, 1, 1], [], []>} : vector<8x32xbf16>, vector<32x64xbf16>, vector<8x64xf32> -> vector<8x64xf32>
    %c0_3 = arith.constant 0 : index
    %c0_4 = arith.constant 0 : index
    %4 = vector.load %arg3[%c0_3, %c0_4] : memref<1x64xf32, #tpu.memory_space<vmem>>, vector<1x64xf32>
    %5 = vector.broadcast %4 : vector<1x64xf32> to vector<8x64xf32>
    %6 = arith.addf %3, %5 : vector<8x64xf32>
    %cst_5 = arith.constant 0.000000e+00 : f32
    %7 = vector.broadcast %cst_5 : f32 to vector<8x64xf32>
    %8 = arith.maximumf %6, %7 : vector<8x64xf32>
    %9 = arith.truncf %8 : vector<8x64xf32> to vector<8x64xbf16>
    %c0_6 = arith.constant 0 : index
    %c0_7 = arith.constant 0 : index
    %10 = vector.load %arg4[%c0_6, %c0_7] : memref<64x32xbf16, #tpu.memory_space<vmem>>, vector<64x32xbf16>
    %cst_8 = arith.constant dense<0.000000e+00> : vector<8x32xf32>
    %11 = tpu.matmul %9, %10, %cst_8 {dimension_numbers = #tpu.dot_dimension_numbers<[1], [0], [0], [1], [0, 0, 1, 1], [], []>} : vector<8x64xbf16>, vector<64x32xbf16>, vector<8x32xf32> -> vector<8x32xf32>
    %c0_9 = arith.constant 0 : index
    %c0_10 = arith.constant 0 : index
    %12 = vector.load %arg5[%c0_9, %c0_10] : memref<1x32xf32, #tpu.memory_space<vmem>>, vector<1x32xf32>
    %13 = vector.broadcast %12 : vector<1x32xf32> to vector<8x32xf32>
    %14 = arith.addf %11, %13 : vector<8x32xf32>
    %15 = arith.addf %0, %14 : vector<8x32xf32>
    %c0_11 = arith.constant 0 : index
    %c0_12 = arith.constant 0 : index
    %16 = vector.load %arg6[%c0_11, %c0_12] : memref<1x32xf32, #tpu.memory_space<vmem>>, vector<1x32xf32>
    %c0_13 = arith.constant 0 : index
    %c0_14 = arith.constant 0 : index
    %17 = vector.load %arg7[%c0_13, %c0_14] : memref<1x32xf32, #tpu.memory_space<vmem>>, vector<1x32xf32>
    %cst_15 = arith.constant dense<0.000000e+00> : vector<8xf32>
    %18 = vector.multi_reduction <add>, %15, %cst_15 [1] : vector<8x32xf32> to vector<8xf32>
    %19 = vector.shape_cast %18 : vector<8xf32> to vector<8x1xf32>
    %cst_16 = arith.constant 3.200000e+01 : f32
    %20 = vector.broadcast %cst_16 : f32 to vector<8x1xf32>
    %21 = arith.divf %19, %20 : vector<8x1xf32>
    %22 = vector.broadcast %21 : vector<8x1xf32> to vector<8x32xf32>
    %23 = arith.subf %15, %22 : vector<8x32xf32>
    %24 = vector.broadcast %21 : vector<8x1xf32> to vector<8x32xf32>
    %25 = arith.subf %15, %24 : vector<8x32xf32>
    %26 = arith.mulf %23, %25 : vector<8x32xf32>
    %cst_17 = arith.constant dense<0.000000e+00> : vector<8xf32>
    %27 = vector.multi_reduction <add>, %26, %cst_17 [1] : vector<8x32xf32> to vector<8xf32>
    %28 = vector.shape_cast %27 : vector<8xf32> to vector<8x1xf32>
    %cst_18 = arith.constant 3.200000e+01 : f32
    %29 = vector.broadcast %cst_18 : f32 to vector<8x1xf32>
    %30 = arith.divf %28, %29 : vector<8x1xf32>
    %31 = vector.broadcast %21 : vector<8x1xf32> to vector<8x32xf32>
    %32 = arith.subf %15, %31 : vector<8x32xf32>
    %cst_19 = arith.constant 9.99999974E-6 : f32
    %33 = vector.broadcast %cst_19 : f32 to vector<8x1xf32>
    %34 = arith.addf %30, %33 : vector<8x1xf32>
    %35 = math.rsqrt %34 : vector<8x1xf32>
    %36 = vector.broadcast %35 : vector<8x1xf32> to vector<8x32xf32>
    %37 = arith.mulf %32, %36 : vector<8x32xf32>
    %38 = vector.broadcast %16 : vector<1x32xf32> to vector<8x32xf32>
    %39 = arith.mulf %37, %38 : vector<8x32xf32>
    %40 = vector.broadcast %17 : vector<1x32xf32> to vector<8x32xf32>
    %41 = arith.addf %39, %40 : vector<8x32xf32>
    %c0_20 = arith.constant 0 : index
    %c0_21 = arith.constant 0 : index
    %42 = vector.load %arg8[%c0_20, %c0_21] : memref<8x32xf32, #tpu.memory_space<vmem>>, vector<8x32xf32>
    tpu.vector_store %arg8[%c0_20, %c0_21], %41 {strides = array<i32>} : memref<8x32xf32, #tpu.memory_space<vmem>>, vector<8x32xf32>,
    return
  }
  func.func @transform_0(%arg0: i32) -> (i32, i32) {
    %c0_i32 = arith.constant 0 : i32
    %c0_i32_0 = arith.constant 0 : i32
    return %arg0, %c0_i32 : i32, i32
  }
  func.func @transform_1(%arg0: i32) -> (i32, i32) {
    %c0_i32 = arith.constant 0 : i32
    %c0_i32_0 = arith.constant 0 : i32
    %c0_i32_1 = arith.constant 0 : i32
    return %c0_i32, %c0_i32_0 : i32, i32
  }
  func.func @transform_2(%arg0: i32) -> (i32, i32) {
    %c0_i32 = arith.constant 0 : i32
    %c0_i32_0 = arith.constant 0 : i32
    %c0_i32_1 = arith.constant 0 : i32
    return %c0_i32, %c0_i32_0 : i32, i32
  }
  func.func @transform_3(%arg0: i32) -> (i32, i32) {
    %c0_i32 = arith.constant 0 : i32
    %c0_i32_0 = arith.constant 0 : i32
    %c0_i32_1 = arith.constant 0 : i32
    return %c0_i32, %c0_i32_0 : i32, i32
  }
  func.func @transform_4(%arg0: i32) -> (i32, i32) {
    %c0_i32 = arith.constant 0 : i32
    %c0_i32_0 = arith.constant 0 : i32
    %c0_i32_1 = arith.constant 0 : i32
    return %c0_i32, %c0_i32_0 : i32, i32
  }
  func.func @transform_5(%arg0: i32) -> (i32, i32) {
    %c0_i32 = arith.constant 0 : i32
    %c0_i32_0 = arith.constant 0 : i32
    %c0_i32_1 = arith.constant 0 : i32
    return %c0_i32, %c0_i32_0 : i32, i32
  }
  func.func @transform_6(%arg0: i32) -> (i32, i32) {
    %c0_i32 = arith.constant 0 : i32
    %c0_i32_0 = arith.constant 0 : i32
    %c0_i32_1 = arith.constant 0 : i32
    return %c0_i32, %c0_i32_0 : i32, i32
  }
  func.func @transform_7(%arg0: i32) -> (i32, i32) {
    %c0_i32 = arith.constant 0 : i32
    %c0_i32_0 = arith.constant 0 : i32
    return %arg0, %c0_i32 : i32, i32
  }
}

</mosaic_0001>

<llo_original>
// kernel: decoder_layer.5
$region0: #{decoder_layer.5}
  #allocation0 [shape = 'u32[]', space=smem, size = 0x4, offset = 0x4, fixed_abs, tag = 'smem constant byte address 0x4 - core index']
  #allocation1 [shape = 'u32[144,128]{1,0:T(1,128)}', space=vmem, size = 0x12000, scoped, tag = 'internal scratch']
  %s0 = inlined_call_operand.vmem [shape: f32[16,32], index: 0, kind: input, shape index: {}]
  %s1 = inlined_call_operand.vmem [shape: bf16[32,64], index: 1, kind: input, shape index: {}]
  %s2 = inlined_call_operand.vmem [shape: f32[1,64], index: 2, kind: input, shape index: {}]
  %s3 = inlined_call_operand.vmem [shape: bf16[64,32], index: 3, kind: input, shape index: {}]
  %s4 = inlined_call_operand.vmem [shape: f32[1,32], index: 4, kind: input, shape index: {}]
  %s5 = inlined_call_operand.vmem [shape: f32[1,32], index: 5, kind: input, shape index: {}]
  %s6 = inlined_call_operand.vmem [shape: f32[1,32], index: 6, kind: input, shape index: {}]
  %s7 = inlined_call_operand.hbm [shape: f32[16,32], index: 7, kind: output, shape index: {}]
  %s8 = sld [smem:[#allocation0]]
  $region61: #{decoder_layer.5} parent=0
    _
  %s10 = ssub.s32 1, %s8
  %s11 = scalar_select 0, %s10, %s8
  $region1: #{decoder_layer.5} parent=0
    #allocation2 [shape = 'u8[8192]{0}', space=vmem, size = 0x2000, scoped, tag = 'output window, operand 0']
    #allocation3 [shape = 's32[2]{0}', space=sflag, size = 0x8, scoped, tag = 'scoped memory for decoder_layer.5']
    %12 = vsyncpa [#allocation3], 0
    %s13 = scalar_lea.sflag [#allocation3], 1
    %14 = vsyncpa %s13, 0
    loop: start=0, step=1, limit=4
    $region2: #{decoder_layer.5} parent=1 // loop_pre_header
      _
    $region3: #{decoder_layer.5} parent=1 // loop_header
      %s16 = sphi 0, %s20
      %p17 = scmp.ge.s32.totalorder %s16, 4
      %s26 = sphi 0, %s28
      %s29 = sphi 0, %s26
      %s30 = sphi 0, %s29
      %s46 = sphi 0, %s30
      %s50 = sphi 0, %s50
      %s52 = sphi 0, %s50
      %s53 = sphi 0, %s52
      %s67 = sphi 0, %s53
      %s71 = sphi 0, %s71
      %s73 = sphi 0, %s71
      %s74 = sphi 0, %s73
      %s88 = sphi 0, %s74
      %s92 = sphi 0, %s92
      %s94 = sphi 0, %s92
      %s95 = sphi 0, %s94
      %s109 = sphi 0, %s95
      %s113 = sphi 0, %s113
      %s115 = sphi 0, %s113
      %s116 = sphi 0, %s115
      %s130 = sphi 0, %s116
      %s134 = sphi 0, %s134
      %s136 = sphi 0, %s134
      %s137 = sphi 0, %s136
      %s151 = sphi 0, %s137
      %s155 = sphi 0, %s155
      %s157 = sphi 0, %s155
      %s158 = sphi 0, %s157
      %s172 = sphi 0, %s158
      %s178 = sphi 0, %s180
      %s181 = sphi 0, %s178
      %s182 = sphi 0, %s181
      %s198 = sphi 0, %s182
    $region4: #{decoder_layer.5} parent=1 // loop_header_branch
      %19 = sbr.rel (%p17) target = $region8
    $region5: #{decoder_layer.5} parent=1 // loop_body
      %s21 = ssub.s32 %s16, 1
      %s22 = ssub.s32 %s16, 2
      %s23 = sadd.s32 %s16, 1
      %s24 = ssub.s32 %s16, %s23
      %p25 = scmp.eq.s32.totalorder %s24, 0
      %s27 = sadd.s32 %s26, 1
      %s28 = scalar_select %p25, %s26, %s27
      %p31 = pneg %p25
      %p32 = scmp.eq.s32.totalorder %s16, 1
      %p33 = por %p31, %p32
      %p34 = scmp.ne.s32.totalorder %s26, %s29
      %p35 = scmp.eq.s32.totalorder %s16, 0
      %p36 = por %p34, %p35
      %p37 = scmp.ne.s32.totalorder %s26, %s29
      %p38 = scmp.eq.s32.totalorder %s21, 1
      %p39 = por %p37, %p38
      %p40 = scmp.ne.s32.totalorder %s29, %s30
      %p41 = scmp.eq.s32.totalorder %s21, 0
      %p42 = por %p40, %p41
      %p43 = scmp.ne.s32.totalorder %s29, %s30
      %p44 = scmp.eq.s32.totalorder %s22, 1
      %p45 = por %p43, %p44
      %p47 = scmp.ne.s32.totalorder %s30, %s46
      %p48 = scmp.eq.s32.totalorder %s22, 0
      %p49 = por %p47, %p48
      %s51 = sadd.s32 %s50, 1
      %p54 = scmp.eq.s32.totalorder %s16, 1
      %p55 = scmp.ne.s32.totalorder %s50, %s52
      %p56 = scmp.eq.s32.totalorder %s16, 0
      %p57 = por %p55, %p56
      %p58 = scmp.ne.s32.totalorder %s50, %s52
      %p59 = scmp.eq.s32.totalorder %s21, 1
      %p60 = por %p58, %p59
      %p61 = scmp.ne.s32.totalorder %s52, %s53
      %p62 = scmp.eq.s32.totalorder %s21, 0
      %p63 = por %p61, %p62
      %p64 = scmp.ne.s32.totalorder %s52, %s53
      %p65 = scmp.eq.s32.totalorder %s22, 1
      %p66 = por %p64, %p65
      %p68 = scmp.ne.s32.totalorder %s53, %s67
      %p69 = scmp.eq.s32.totalorder %s22, 0
      %p70 = por %p68, %p69
      %s72 = sadd.s32 %s71, 1
      %p75 = scmp.eq.s32.totalorder %s16, 1
      %p76 = scmp.ne.s32.totalorder %s71, %s73
      %p77 = scmp.eq.s32.totalorder %s16, 0
      %p78 = por %p76, %p77
      %p79 = scmp.ne.s32.totalorder %s71, %s73
      %p80 = scmp.eq.s32.totalorder %s21, 1
      %p81 = por %p79, %p80
      %p82 = scmp.ne.s32.totalorder %s73, %s74
      %p83 = scmp.eq.s32.totalorder %s21, 0
      %p84 = por %p82, %p83
      %p85 = scmp.ne.s32.totalorder %s73, %s74
      %p86 = scmp.eq.s32.totalorder %s22, 1
      %p87 = por %p85, %p86
      %p89 = scmp.ne.s32.totalorder %s74, %s88
      %p90 = scmp.eq.s32.totalorder %s22, 0
      %p91 = por %p89, %p90
      %s93 = sadd.s32 %s92, 1
      %p96 = scmp.eq.s32.totalorder %s16, 1
      %p97 = scmp.ne.s32.totalorder %s92, %s94
      %p98 = scmp.eq.s32.totalorder %s16, 0
      %p99 = por %p97, %p98
      %p100 = scmp.ne.s32.totalorder %s92, %s94
      %p101 = scmp.eq.s32.totalorder %s21, 1
      %p102 = por %p100, %p101
      %p103 = scmp.ne.s32.totalorder %s94, %s95
      %p104 = scmp.eq.s32.totalorder %s21, 0
      %p105 = por %p103, %p104
      %p106 = scmp.ne.s32.totalorder %s94, %s95
      %p107 = scmp.eq.s32.totalorder %s22, 1
      %p108 = por %p106, %p107
      %p110 = scmp.ne.s32.totalorder %s95, %s109
      %p111 = scmp.eq.s32.totalorder %s22, 0
      %p112 = por %p110, %p111
      %s114 = sadd.s32 %s113, 1
      %p117 = scmp.eq.s32.totalorder %s16, 1
      %p118 = scmp.ne.s32.totalorder %s113, %s115
      %p119 = scmp.eq.s32.totalorder %s16, 0
      %p120 = por %p118, %p119
      %p121 = scmp.ne.s32.totalorder %s113, %s115
      %p122 = scmp.eq.s32.totalorder %s21, 1
      %p123 = por %p121, %p122
      %p124 = scmp.ne.s32.totalorder %s115, %s116
      %p125 = scmp.eq.s32.totalorder %s21, 0
      %p126 = por %p124, %p125
      %p127 = scmp.ne.s32.totalorder %s115, %s116
      %p128 = scmp.eq.s32.totalorder %s22, 1
      %p129 = por %p127, %p128
      %p131 = scmp.ne.s32.totalorder %s116, %s130
      %p132 = scmp.eq.s32.totalorder %s22, 0
      %p133 = por %p131, %p132
      %s135 = sadd.s32 %s134, 1
      %p138 = scmp.eq.s32.totalorder %s16, 1
      %p139 = scmp.ne.s32.totalorder %s134, %s136
      %p140 = scmp.eq.s32.totalorder %s16, 0
      %p141 = por %p139, %p140
      %p142 = scmp.ne.s32.totalorder %s134, %s136
      %p143 = scmp.eq.s32.totalorder %s21, 1
      %p144 = por %p142, %p143
      %p145 = scmp.ne.s32.totalorder %s136, %s137
      %p146 = scmp.eq.s32.totalorder %s21, 0
      %p147 = por %p145, %p146
      %p148 = scmp.ne.s32.totalorder %s136, %s137
      %p149 = scmp.eq.s32.totalorder %s22, 1
      %p150 = por %p148, %p149
      %p152 = scmp.ne.s32.totalorder %s137, %s151
      %p153 = scmp.eq.s32.totalorder %s22, 0
      %p154 = por %p152, %p153
      %s156 = sadd.s32 %s155, 1
      %p159 = scmp.eq.s32.totalorder %s16, 1
      %p160 = scmp.ne.s32.totalorder %s155, %s157
      %p161 = scmp.eq.s32.totalorder %s16, 0
      %p162 = por %p160, %p161
      %p163 = scmp.ne.s32.totalorder %s155, %s157
      %p164 = scmp.eq.s32.totalorder %s21, 1
      %p165 = por %p163, %p164
      %p166 = scmp.ne.s32.totalorder %s157, %s158
      %p167 = scmp.eq.s32.totalorder %s21, 0
      %p168 = por %p166, %p167
      %p169 = scmp.ne.s32.totalorder %s157, %s158
      %p170 = scmp.eq.s32.totalorder %s22, 1
      %p171 = por %p169, %p170
      %p173 = scmp.ne.s32.totalorder %s158, %s172
      %p174 = scmp.eq.s32.totalorder %s22, 0
      %p175 = por %p173, %p174
      %s176 = ssub.s32 %s16, %s23
      %p177 = scmp.eq.s32.totalorder %s176, 0
      %s179 = sadd.s32 %s178, 1
      %s180 = scalar_select %p177, %s178, %s179
      %p183 = pneg %p177
      %p184 = scmp.eq.s32.totalorder %s16, 1
      %p185 = por %p183, %p184
      %p186 = scmp.ne.s32.totalorder %s178, %s181
      %p187 = scmp.eq.s32.totalorder %s16, 0
      %p188 = por %p186, %p187
      %p189 = scmp.ne.s32.totalorder %s178, %s181
      %p190 = scmp.eq.s32.totalorder %s21, 1
      %p191 = por %p189, %p190
      %p192 = scmp.ne.s32.totalorder %s181, %s182
      %p193 = scmp.eq.s32.totalorder %s21, 0
      %p194 = por %p192, %p193
      %p195 = scmp.ne.s32.totalorder %s181, %s182
      %p196 = scmp.eq.s32.totalorder %s22, 1
      %p197 = por %p195, %p196
      %p199 = scmp.ne.s32.totalorder %s182, %s198
      %p200 = scmp.eq.s32.totalorder %s22, 0
      %p201 = por %p199, %p200
      %p202 = scmp.le.s32.totalorder 1, %s16
      %p203 = scmp.lt.s32.totalorder %s16, 3
      %p204 = pnand %p202, %p203
      %p205 = pneg %p204
      // Predicated region
      $region9: #{decoder_layer.5} parent=5 // pred_check
        _
      $region10: #{decoder_layer.5} parent=5 // pred_check_branch
        %207 = sbr.rel (%p204) target = $region12
      $region11: #{decoder_layer.5} parent=5 // pred_region
        %s208 = ssub.s32 %s16, 1
        // Predicated region
        $region13: #{decoder_layer.5} parent=11 // pred_check
          %p209 = pneg %p63
        $region14: #{decoder_layer.5} parent=11 // pred_check_branch
          %211 = sbr.rel (%p209) target = $region16
        $region15: #{decoder_layer.5} parent=11 // pred_region
          _
        $region16: #{decoder_layer.5} parent=11 // pred_fallthru
          _
        // Predicated region
        $region17: #{decoder_layer.5} parent=11 // pred_check
          %p212 = pneg %p84
        $region18: #{decoder_layer.5} parent=11 // pred_check_branch
          %214 = sbr.rel (%p212) target = $region20
        $region19: #{decoder_layer.5} parent=11 // pred_region
          _
        $region20: #{decoder_layer.5} parent=11 // pred_fallthru
          _
        // Predicated region
        $region21: #{decoder_layer.5} parent=11 // pred_check
          %p215 = pneg %p105
        $region22: #{decoder_layer.5} parent=11 // pred_check_branch
          %217 = sbr.rel (%p215) target = $region24
        $region23: #{decoder_layer.5} parent=11 // pred_region
          _
        $region24: #{decoder_layer.5} parent=11 // pred_fallthru
          _
        // Predicated region
        $region25: #{decoder_layer.5} parent=11 // pred_check
          %p218 = pneg %p126
        $region26: #{decoder_layer.5} parent=11 // pred_check_branch
          %220 = sbr.rel (%p218) target = $region28
        $region27: #{decoder_layer.5} parent=11 // pred_region
          _
        $region28: #{decoder_layer.5} parent=11 // pred_fallthru
          _
        // Predicated region
        $region29: #{decoder_layer.5} parent=11 // pred_check
          %p221 = pneg %p147
        $region30: #{decoder_layer.5} parent=11 // pred_check_branch
          %223 = sbr.rel (%p221) target = $region32
        $region31: #{decoder_layer.5} parent=11 // pred_region
          _
        $region32: #{decoder_layer.5} parent=11 // pred_fallthru
          _
        // Predicated region
        $region33: #{decoder_layer.5} parent=11 // pred_check
          %p224 = pneg %p168
        $region34: #{decoder_layer.5} parent=11 // pred_check_branch
          %226 = sbr.rel (%p224) target = $region36
        $region35: #{decoder_layer.5} parent=11 // pred_region
          _
        $region36: #{decoder_layer.5} parent=11 // pred_fallthru
          _
      $region12: #{decoder_layer.5} parent=5 // pred_fallthru
        _
      %p227 = scmp.lt.s32.totalorder %s16, 2
      // Predicated region
      $region37: #{decoder_layer.5} parent=5 // pred_check
        %p228 = pneg %p227
      $region38: #{decoder_layer.5} parent=5 // pred_check_branch
        %230 = sbr.rel (%p228) target = $region40
      $region39: #{decoder_layer.5} parent=5 // pred_region
        // Predicated region
        $region41: #{decoder_layer.5} parent=39 // pred_check
          %p231 = pneg %p36
        $region42: #{decoder_layer.5} parent=39 // pred_check_branch
          %233 = sbr.rel (%p231) target = $region44
        $region43: #{decoder_layer.5} parent=39 // pred_region
          %p234 = scmp.lt.s32.totalorder %s16, 1
          %s235 = scalar_select %p234, %s16, 1
          %s236 = smul.addr %s235, 8
          %s237 = scalar_lea.vmem %s0, %s236
        $region44: #{decoder_layer.5} parent=39 // pred_fallthru
          _
      $region40: #{decoder_layer.5} parent=5 // pred_fallthru
        _
      %p238 = scmp.le.s32.totalorder 1, %s16
      %p239 = scmp.lt.s32.totalorder %s16, 3
      %p240 = pnand %p238, %p239
      %p241 = pneg %p240
      // Predicated region
      $region45: #{decoder_layer.5} parent=5 // pred_check
        _
      $region46: #{decoder_layer.5} parent=5 // pred_check_branch
        %243 = sbr.rel (%p240) target = $region48
      $region47: #{decoder_layer.5} parent=5 // pred_region
        %s244 = ssub.s32 %s16, 1
        %p245 = scmp.lt.s32.totalorder %s21, 1
        %s246 = scalar_select %p245, %s21, 1
        %s247 = smul.addr %s246, 8
        %s248 = scalar_lea.vmem %s0, %s247
        %p249 = pneg %p42
        %p250 = pneg %p39
        %p251 = pneg %p63
        %p252 = pneg %p60
        %p253 = pneg %p84
        %p254 = pneg %p81
        %p255 = pneg %p105
        %p256 = pneg %p102
        %p257 = pneg %p126
        %p258 = pneg %p123
        %p259 = pneg %p147
        %p260 = pneg %p144
        %p261 = pneg %p168
        %p262 = pneg %p165
        %p263 = pneg %p194
        %p264 = pneg %p191
        %s265 = sand.u32 %s181, 1
        %s266 = scalar_lea.sflag [#allocation3], %s265
        %s267 = sand.u32 %s181, 1
        %s268 = smul.addr %s267, 8
        %s269 = scalar_lea.vmem [#allocation2], %s268
        %p270 = scmp.lt.s32.totalorder %s21, 1
        %s271 = scalar_select %p270, %s21, 1
        %s272 = smul.addr %s271, 8
        %s273 = scalar_lea.vmem %s0, %s272
        %v275 = vld [vmem:[%s273] sm:$0xff]
        %v276 = vpack.c.bf16 %v275, %v275
        %v277 = vld [vmem:[%s1] sm:$0xf]
        %v278 = vld [vmem:[%s1 + $0x4] sm:$0xf]
        %v279 = vld [vmem:[%s1 + $0x8] sm:$0xf]
        %v280 = vld [vmem:[%s1 + $0xc] sm:$0xf]
        %v281 = vld [vmem:[%s2] sm:$0x1]
        %v283 = vlaneseq
        %v284 = vshrl.u32 %v283, 7
        %v285 = vsub.s32 0, %v284
        %v286 = vrot.slane %v281, %v285
        %v292 = vunpack.c.l.b16 %v277
        %v293 = vunpack.c.l.b16 %v278
        %v294 = vunpack.c.l.b16 %v279
        %v295 = vunpack.c.l.b16 %v280
        %v296 = vpack.c.b16 %v293, %v292
        %v297 = vpack.c.b16 %v295, %v294
        %vm300 = vcmask 261120
        %v302 = vsel %vm300, %v276, 0
        %304 = vmatprep.subr.bf16.mxu0 0
        %305 = vmatpush1.bf16.msra.mxu0 0
        %306 = vmatprep.subr.bf16.mxu0 0
        %307 = vmatpush1.bf16.msra.mxu0 0
        %308 = vmatprep.subr.bf16.mxu0 0
        %309 = vmatpush1.bf16.msra.mxu0 0
        %310 = vmatprep.subr.bf16.mxu0 0
        %311 = vmatpush1.bf16.msra.mxu0 0
        %312 = vmatprep.subr.bf16.mxu0 0
        %313 = vmatpush1.bf16.msra.mxu0 0
        %314 = vmatprep.subr.bf16.mxu0 0
        %315 = vmatpush1.bf16.msra.mxu0 0
        %316 = vmatprep.subr.bf16.mxu0 0
        %317 = vmatpush1.bf16.msra.mxu0 %v297
        %318 = vmatprep.subr.bf16.mxu0 0
        %319 = vmatpush1.bf16.msra.mxu0 %v296
        %320 = vmatprep.subr.bf16.mxu0 0
        %321 = vmatpush2.bf16.msra.mxu0 0
        %322 = vmatprep.subr.bf16.mxu0 0
        %323 = vmatpush2.bf16.msra.mxu0 0
        %324 = vmatprep.subr.bf16.mxu0 0
        %325 = vmatpush2.bf16.msra.mxu0 0
        %326 = vmatprep.subr.bf16.mxu0 0
        %327 = vmatpush2.bf16.msra.mxu0 0
        %328 = vmatprep.subr.bf16.mxu0 0
        %329 = vmatpush2.bf16.msra.mxu0 0
        %330 = vmatprep.subr.bf16.mxu0 0
        %331 = vmatpush2.bf16.msra.mxu0 0
        %332 = vmatprep.subr.bf16.mxu0 0
        %333 = vmatpush2.bf16.msra.mxu0 0
        %334 = vmatprep.subr.bf16.mxu0 0
        %335 = vmatpush2.bf16.msra.mxu0 0
        %336 = vmatprep.mubr.bf16.mxu0 0
        %337 = vmatmul.mubr.bf16.gmra.mxu0 %v302
        %v338 = vpop.f32.mrf.mxu0
        %v339 = vadd.f32 %v286, %v338
        %v340 = vpop.f32.mrf.mxu0
        %v341 = vpop.f32.mrf.mxu0
        %v342 = vpop.f32.mrf.mxu0
        %343 = vdwg.mxu0
        %v344 = vmax.f32 %v339, 0.0
        %v345 = vpack.c.bf16 %v344, %v344
        %v346 = vld [vmem:[%s3] sm:$0xf]
        %v347 = vld [vmem:[%s3 + $0x4] sm:$0xf]
        %v348 = vld [vmem:[%s3 + $0x8] sm:$0xf]
        %v349 = vld [vmem:[%s3 + $0xc] sm:$0xf]
        %v350 = vld [vmem:[%s3 + $0x10] sm:$0xf]
        %v351 = vld [vmem:[%s3 + $0x14] sm:$0xf]
        %v352 = vld [vmem:[%s3 + $0x18] sm:$0xf]
        %v353 = vld [vmem:[%s3 + $0x1c] sm:$0xf]
        %v354 = vld [vmem:[%s4] sm:$0x1]
        %v356 = vlaneseq
        %v357 = vshrl.u32 %v356, 7
        %v358 = vsub.s32 0, %v357
        %v359 = vrot.slane %v354, %v358
        %v369 = vunpack.c.l.b16 %v346
        %v370 = vunpack.c.l.b16 %v347
        %v371 = vunpack.c.l.b16 %v348
        %v372 = vunpack.c.l.b16 %v349
        %v373 = vunpack.c.l.b16 %v350
        %v374 = vunpack.c.l.b16 %v351
        %v375 = vunpack.c.l.b16 %v352
        %v376 = vunpack.c.l.b16 %v353
        %v377 = vpack.c.b16 %v370, %v369
        %v378 = vpack.c.b16 %v372, %v371
        %v379 = vpack.c.b16 %v374, %v373
        %v380 = vpack.c.b16 %v376, %v375
        %vm385 = vcmask 523264
        %v387 = vsel %vm385, %v345, 0
        %389 = vmatprep.subr.bf16.mxu0 0
        %390 = vmatpush1.bf16.msra.mxu0 0
        %391 = vmatprep.subr.bf16.mxu0 0
        %392 = vmatpush1.bf16.msra.mxu0 0
        %393 = vmatprep.subr.bf16.mxu0 0
        %394 = vmatpush1.bf16.msra.mxu0 0
        %395 = vmatprep.subr.bf16.mxu0 0
        %396 = vmatpush1.bf16.msra.mxu0 0
        %397 = vmatprep.subr.bf16.mxu0 0
        %398 = vmatpush1.bf16.msra.mxu0 %v380
        %399 = vmatprep.subr.bf16.mxu0 0
        %400 = vmatpush1.bf16.msra.mxu0 %v379
        %401 = vmatprep.subr.bf16.mxu0 0
        %402 = vmatpush1.bf16.msra.mxu0 %v378
        %403 = vmatprep.subr.bf16.mxu0 0
        %404 = vmatpush1.bf16.msra.mxu0 %v377
        %405 = vmatprep.subr.bf16.mxu0 0
        %406 = vmatpush2.bf16.msra.mxu0 0
        %407 = vmatprep.subr.bf16.mxu0 0
        %408 = vmatpush2.bf16.msra.mxu0 0
        %409 = vmatprep.subr.bf16.mxu0 0
        %410 = vmatpush2.bf16.msra.mxu0 0
        %411 = vmatprep.subr.bf16.mxu0 0
        %412 = vmatpush2.bf16.msra.mxu0 0
        %413 = vmatprep.subr.bf16.mxu0 0
        %414 = vmatpush2.bf16.msra.mxu0 0
        %415 = vmatprep.subr.bf16.mxu0 0
        %416 = vmatpush2.bf16.msra.mxu0 0
        %417 = vmatprep.subr.bf16.mxu0 0
        %418 = vmatpush2.bf16.msra.mxu0 0
        %419 = vmatprep.subr.bf16.mxu0 0
        %420 = vmatpush2.bf16.msra.mxu0 0
        %421 = vmatprep.mubr.bf16.mxu0 0
        %422 = vmatmul.mubr.bf16.gmra.mxu0 %v387
        %v423 = vpop.f32.mrf.mxu0
        %v424 = vadd.f32 %v359, %v423
        %v425 = vpop.f32.mrf.mxu0
        %v426 = vpop.f32.mrf.mxu0
        %v427 = vpop.f32.mrf.mxu0
        %428 = vdwg.mxu0
        %v429 = vadd.f32 %v275, %v424
        %v430 = vld [vmem:[%s5] sm:$0x1]
        %v431 = vld [vmem:[%s6] sm:$0x1]
        %v432 = vsel %vm300, %v429, 0.0
        %433 = vadd.xlane.f32.xlu0 %v432
        %v434 = vpop.xlane.xlu0 %433
        %v435 = vrcp.pop 32.0
        %v436 = vmul.f32 %v434, %v435
        %v437 = vsub.f32 %v429, %v436
        %v438 = vmul.f32 %v437, %v437
        %v439 = vsel %vm300, %v438, 0.0
        %440 = vadd.xlane.f32.xlu0 %v439
        %v441 = vpop.xlane.xlu0 %440
        %v442 = vmul.f32 %v441, %v435
        %v443 = vadd.f32 %v442, 1e-05
        %v444 = vrsqrt.pop %v443
        %v445 = vmul.f32 %v437, %v444
        %v447 = vlaneseq
        %v448 = vshrl.u32 %v447, 7
        %v449 = vsub.s32 0, %v448
        %v450 = vrot.slane %v430, %v449
        %v452 = vmul.f32 %v445, %v450
        %v454 = vlaneseq
        %v455 = vshrl.u32 %v454, 7
        %v456 = vsub.s32 0, %v455
        %v457 = vrot.slane %v431, %v456
        %v459 = vadd.f32 %v452, %v457
        %460 = vst.msk [vmem:[%s269] sm:$0xff] %vm300, %v459
        %s461 = sand.u32 %s181, 1
        %s462 = scalar_lea.sflag [#allocation3], %s461
        %s463 = sand.u32 %s181, 1
        %s464 = smul.addr %s463, 8
        %s465 = scalar_lea.vmem [#allocation2], %s464
        // Predicated region
        $region49: #{decoder_layer.5} parent=47 // pred_check
          %p466 = pneg %p191
        $region50: #{decoder_layer.5} parent=47 // pred_check_branch
          %468 = sbr.rel (%p466) target = $region52
        $region51: #{decoder_layer.5} parent=47 // pred_region
          %s470 = ssub.s32 128, 128
          %471 = vsyncadd %s462, %s470
          %s472 = smul.addr %s21, 128
          %s473 = scalar_lea.hbm %s7, %s472
          %s475 = sshll.u32 %s465, 4
          %s476 = int_to_ptr.vmem [resolvable:$true] %s475
          %478 = dma.vmem_to_hbm [thread:$0]  %s476, 128, %s473, %s462
        $region52: #{decoder_layer.5} parent=47 // pred_fallthru
          _
      $region48: #{decoder_layer.5} parent=5 // pred_fallthru
        _
      %p479 = scmp.le.s32.totalorder 2, %s16
      // Predicated region
      $region53: #{decoder_layer.5} parent=5 // pred_check
        %p480 = pneg %p479
      $region54: #{decoder_layer.5} parent=5 // pred_check_branch
        %482 = sbr.rel (%p480) target = $region56
      $region55: #{decoder_layer.5} parent=5 // pred_region
        %s483 = ssub.s32 %s16, 2
        // Predicated region
        $region57: #{decoder_layer.5} parent=55 // pred_check
          %p484 = pneg %p197
        $region58: #{decoder_layer.5} parent=55 // pred_check_branch
          %486 = sbr.rel (%p484) target = $region60
        $region59: #{decoder_layer.5} parent=55 // pred_region
          %s487 = sand.u32 %s182, 1
          %s488 = scalar_lea.sflag [#allocation3], %s487
          %s489 = sand.u32 %s182, 1
          %s490 = smul.addr %s489, 8
          %s491 = scalar_lea.vmem [#allocation2], %s490
          %492 = dma.done %s488, 128
        $region60: #{decoder_layer.5} parent=55 // pred_fallthru
          _
      $region56: #{decoder_layer.5} parent=5 // pred_fallthru
        _
    $region6: #{decoder_layer.5} parent=1 // loop_footer
      %s20 = sadd.s32 1, %s16
    $region7: #{decoder_layer.5} parent=1 // loop_footer_branch
      %15 = sbr.rel target = $region3
    $region8: #{decoder_layer.5} parent=1 // loop_exit
      _
    %493 = vsyncpa [#allocation3], 1
    %s494 = scalar_lea.sflag [#allocation3], 1
    %495 = vsyncpa %s494, 1

// kernel: decoder_layer.3
$region0: #{decoder_layer.3}
  #allocation0 [shape = 'u32[]', space=smem, size = 0x4, offset = 0x4, fixed_abs, tag = 'smem constant byte address 0x4 - core index']
  #allocation1 [shape = 'u32[144,128]{1,0:T(1,128)}', space=vmem, size = 0x12000, scoped, tag = 'internal scratch']
  %s0 = inlined_call_operand.vmem [shape: f32[2,8,32], index: 0, kind: input, shape index: {}, may-alias: {0,1}]
  %s1 = inlined_call_operand.vmem [shape: f32[2,8,32], index: 1, kind: input, shape index: {}, may-alias: {0,1}]
  %s2 = inlined_call_operand.vmem [shape: f32[2,8,8], index: 2, kind: input, shape index: {}]
  %s3 = inlined_call_operand.vmem [shape: bf16[32,32], index: 3, kind: input, shape index: {}]
  %s4 = inlined_call_operand.vmem [shape: f32[1,32], index: 4, kind: input, shape index: {}]
  %s5 = inlined_call_operand.vmem [shape: bf16[32,64], index: 5, kind: input, shape index: {}]
  %s6 = inlined_call_operand.vmem [shape: f32[1,64], index: 6, kind: input, shape index: {}]
  %s7 = inlined_call_operand.vmem [shape: f32[32,32], index: 7, kind: input, shape index: {}]
  %s8 = inlined_call_operand.vmem [shape: f32[1,32], index: 8, kind: input, shape index: {}]
  %s9 = inlined_call_operand.vmem [shape: f32[1,32], index: 9, kind: input, shape index: {}]
  %s10 = inlined_call_operand.vmem [shape: f32[1,32], index: 10, kind: input, shape index: {}]
  %s11 = inlined_call_operand.vmem [shape: f32[2,8,32], index: 11, kind: output, shape index: {}]
  %s12 = sld [smem:[#allocation0]]
  $region77: #{decoder_layer.3} parent=0
    _
  %s14 = ssub.s32 1, %s12
  %s15 = scalar_select 0, %s14, %s12
  loop: start=0, step=1, limit=4
  $region2: #{decoder_layer.3} parent=0 // loop_pre_header
    _
  $region3: #{decoder_layer.3} parent=0 // loop_header
    %s17 = sphi 0, %s21
    %p18 = scmp.ge.s32.totalorder %s17, 4
    %s27 = sphi 0, %s29
    %s30 = sphi 0, %s27
    %s31 = sphi 0, %s30
    %s47 = sphi 0, %s31
    %s53 = sphi 0, %s55
    %s56 = sphi 0, %s53
    %s57 = sphi 0, %s56
    %s73 = sphi 0, %s57
    %s79 = sphi 0, %s81
    %s82 = sphi 0, %s79
    %s83 = sphi 0, %s82
    %s99 = sphi 0, %s83
    %s103 = sphi 0, %s103
    %s105 = sphi 0, %s103
    %s106 = sphi 0, %s105
    %s120 = sphi 0, %s106
    %s124 = sphi 0, %s124
    %s126 = sphi 0, %s124
    %s127 = sphi 0, %s126
    %s141 = sphi 0, %s127
    %s145 = sphi 0, %s145
    %s147 = sphi 0, %s145
    %s148 = sphi 0, %s147
    %s162 = sphi 0, %s148
    %s166 = sphi 0, %s166
    %s168 = sphi 0, %s166
    %s169 = sphi 0, %s168
    %s183 = sphi 0, %s169
    %s187 = sphi 0, %s187
    %s189 = sphi 0, %s187
    %s190 = sphi 0, %s189
    %s204 = sphi 0, %s190
    %s208 = sphi 0, %s208
    %s210 = sphi 0, %s208
    %s211 = sphi 0, %s210
    %s225 = sphi 0, %s211
    %s229 = sphi 0, %s229
    %s231 = sphi 0, %s229
    %s232 = sphi 0, %s231
    %s246 = sphi 0, %s232
    %s250 = sphi 0, %s250
    %s252 = sphi 0, %s250
    %s253 = sphi 0, %s252
    %s267 = sphi 0, %s253
    %s273 = sphi 0, %s275
    %s276 = sphi 0, %s273
    %s277 = sphi 0, %s276
    %s293 = sphi 0, %s277
  $region4: #{decoder_layer.3} parent=0 // loop_header_branch
    %20 = sbr.rel (%p18) target = $region8
  $region5: #{decoder_layer.3} parent=0 // loop_body
    %s22 = ssub.s32 %s17, 1
    %s23 = ssub.s32 %s17, 2
    %s24 = sadd.s32 %s17, 1
    %s25 = ssub.s32 %s17, %s24
    %p26 = scmp.eq.s32.totalorder %s25, 0
    %s28 = sadd.s32 %s27, 1
    %s29 = scalar_select %p26, %s27, %s28
    %p32 = pneg %p26
    %p33 = scmp.eq.s32.totalorder %s17, 1
    %p34 = por %p32, %p33
    %p35 = scmp.ne.s32.totalorder %s27, %s30
    %p36 = scmp.eq.s32.totalorder %s17, 0
    %p37 = por %p35, %p36
    %p38 = scmp.ne.s32.totalorder %s27, %s30
    %p39 = scmp.eq.s32.totalorder %s22, 1
    %p40 = por %p38, %p39
    %p41 = scmp.ne.s32.totalorder %s30, %s31
    %p42 = scmp.eq.s32.totalorder %s22, 0
    %p43 = por %p41, %p42
    %p44 = scmp.ne.s32.totalorder %s30, %s31
    %p45 = scmp.eq.s32.totalorder %s23, 1
    %p46 = por %p44, %p45
    %p48 = scmp.ne.s32.totalorder %s31, %s47
    %p49 = scmp.eq.s32.totalorder %s23, 0
    %p50 = por %p48, %p49
    %s51 = ssub.s32 %s17, %s24
    %p52 = scmp.eq.s32.totalorder %s51, 0
    %s54 = sadd.s32 %s53, 1
    %s55 = scalar_select %p52, %s53, %s54
    %p58 = pneg %p52
    %p59 = scmp.eq.s32.totalorder %s17, 1
    %p60 = por %p58, %p59
    %p61 = scmp.ne.s32.totalorder %s53, %s56
    %p62 = scmp.eq.s32.totalorder %s17, 0
    %p63 = por %p61, %p62
    %p64 = scmp.ne.s32.totalorder %s53, %s56
    %p65 = scmp.eq.s32.totalorder %s22, 1
    %p66 = por %p64, %p65
    %p67 = scmp.ne.s32.totalorder %s56, %s57
    %p68 = scmp.eq.s32.totalorder %s22, 0
    %p69 = por %p67, %p68
    %p70 = scmp.ne.s32.totalorder %s56, %s57
    %p71 = scmp.eq.s32.totalorder %s23, 1
    %p72 = por %p70, %p71
    %p74 = scmp.ne.s32.totalorder %s57, %s73
    %p75 = scmp.eq.s32.totalorder %s23, 0
    %p76 = por %p74, %p75
    %s77 = ssub.s32 %s17, %s24
    %p78 = scmp.eq.s32.totalorder %s77, 0
    %s80 = sadd.s32 %s79, 1
    %s81 = scalar_select %p78, %s79, %s80
    %p84 = pneg %p78
    %p85 = scmp.eq.s32.totalorder %s17, 1
    %p86 = por %p84, %p85
    %p87 = scmp.ne.s32.totalorder %s79, %s82
    %p88 = scmp.eq.s32.totalorder %s17, 0
    %p89 = por %p87, %p88
    %p90 = scmp.ne.s32.totalorder %s79, %s82
    %p91 = scmp.eq.s32.totalorder %s22, 1
    %p92 = por %p90, %p91
    %p93 = scmp.ne.s32.totalorder %s82, %s83
    %p94 = scmp.eq.s32.totalorder %s22, 0
    %p95 = por %p93, %p94
    %p96 = scmp.ne.s32.totalorder %s82, %s83
    %p97 = scmp.eq.s32.totalorder %s23, 1
    %p98 = por %p96, %p97
    %p100 = scmp.ne.s32.totalorder %s83, %s99
    %p101 = scmp.eq.s32.totalorder %s23, 0
    %p102 = por %p100, %p101
    %s104 = sadd.s32 %s103, 1
    %p107 = scmp.eq.s32.totalorder %s17, 1
    %p108 = scmp.ne.s32.totalorder %s103, %s105
    %p109 = scmp.eq.s32.totalorder %s17, 0
    %p110 = por %p108, %p109
    %p111 = scmp.ne.s32.totalorder %s103, %s105
    %p112 = scmp.eq.s32.totalorder %s22, 1
    %p113 = por %p111, %p112
    %p114 = scmp.ne.s32.totalorder %s105, %s106
    %p115 = scmp.eq.s32.totalorder %s22, 0
    %p116 = por %p114, %p115
    %p117 = scmp.ne.s32.totalorder %s105, %s106
    %p118 = scmp.eq.s32.totalorder %s23, 1
    %p119 = por %p117, %p118
    %p121 = scmp.ne.s32.totalorder %s106, %s120
    %p122 = scmp.eq.s32.totalorder %s23, 0
    %p123 = por %p121, %p122
    %s125 = sadd.s32 %s124, 1
    %p128 = scmp.eq.s32.totalorder %s17, 1
    %p129 = scmp.ne.s32.totalorder %s124, %s126
    %p130 = scmp.eq.s32.totalorder %s17, 0
    %p131 = por %p129, %p130
    %p132 = scmp.ne.s32.totalorder %s124, %s126
    %p133 = scmp.eq.s32.totalorder %s22, 1
    %p134 = por %p132, %p133
    %p135 = scmp.ne.s32.totalorder %s126, %s127
    %p136 = scmp.eq.s32.totalorder %s22, 0
    %p137 = por %p135, %p136
    %p138 = scmp.ne.s32.totalorder %s126, %s127
    %p139 = scmp.eq.s32.totalorder %s23, 1
    %p140 = por %p138, %p139
    %p142 = scmp.ne.s32.totalorder %s127, %s141
    %p143 = scmp.eq.s32.totalorder %s23, 0
    %p144 = por %p142, %p143
    %s146 = sadd.s32 %s145, 1
    %p149 = scmp.eq.s32.totalorder %s17, 1
    %p150 = scmp.ne.s32.totalorder %s145, %s147
    %p151 = scmp.eq.s32.totalorder %s17, 0
    %p152 = por %p150, %p151
    %p153 = scmp.ne.s32.totalorder %s145, %s147
    %p154 = scmp.eq.s32.totalorder %s22, 1
    %p155 = por %p153, %p154
    %p156 = scmp.ne.s32.totalorder %s147, %s148
    %p157 = scmp.eq.s32.totalorder %s22, 0
    %p158 = por %p156, %p157
    %p159 = scmp.ne.s32.totalorder %s147, %s148
    %p160 = scmp.eq.s32.totalorder %s23, 1
    %p161 = por %p159, %p160
    %p163 = scmp.ne.s32.totalorder %s148, %s162
    %p164 = scmp.eq.s32.totalorder %s23, 0
    %p165 = por %p163, %p164
    %s167 = sadd.s32 %s166, 1
    %p170 = scmp.eq.s32.totalorder %s17, 1
    %p171 = scmp.ne.s32.totalorder %s166, %s168
    %p172 = scmp.eq.s32.totalorder %s17, 0
    %p173 = por %p171, %p172
    %p174 = scmp.ne.s32.totalorder %s166, %s168
    %p175 = scmp.eq.s32.totalorder %s22, 1
    %p176 = por %p174, %p175
    %p177 = scmp.ne.s32.totalorder %s168, %s169
    %p178 = scmp.eq.s32.totalorder %s22, 0
    %p179 = por %p177, %p178
    %p180 = scmp.ne.s32.totalorder %s168, %s169
    %p181 = scmp.eq.s32.totalorder %s23, 1
    %p182 = por %p180, %p181
    %p184 = scmp.ne.s32.totalorder %s169, %s183
    %p185 = scmp.eq.s32.totalorder %s23, 0
    %p186 = por %p184, %p185
    %s188 = sadd.s32 %s187, 1
    %p191 = scmp.eq.s32.totalorder %s17, 1
    %p192 = scmp.ne.s32.totalorder %s187, %s189
    %p193 = scmp.eq.s32.totalorder %s17, 0
    %p194 = por %p192, %p193
    %p195 = scmp.ne.s32.totalorder %s187, %s189
    %p196 = scmp.eq.s32.totalorder %s22, 1
    %p197 = por %p195, %p196
    %p198 = scmp.ne.s32.totalorder %s189, %s190
    %p199 = scmp.eq.s32.totalorder %s22, 0
    %p200 = por %p198, %p199
    %p201 = scmp.ne.s32.totalorder %s189, %s190
    %p202 = scmp.eq.s32.totalorder %s23, 1
    %p203 = por %p201, %p202
    %p205 = scmp.ne.s32.totalorder %s190, %s204
    %p206 = scmp.eq.s32.totalorder %s23, 0
    %p207 = por %p205, %p206
    %s209 = sadd.s32 %s208, 1
    %p212 = scmp.eq.s32.totalorder %s17, 1
    %p213 = scmp.ne.s32.totalorder %s208, %s210
    %p214 = scmp.eq.s32.totalorder %s17, 0
    %p215 = por %p213, %p214
    %p216 = scmp.ne.s32.totalorder %s208, %s210
    %p217 = scmp.eq.s32.totalorder %s22, 1
    %p218 = por %p216, %p217
    %p219 = scmp.ne.s32.totalorder %s210, %s211
    %p220 = scmp.eq.s32.totalorder %s22, 0
    %p221 = por %p219, %p220
    %p222 = scmp.ne.s32.totalorder %s210, %s211
    %p223 = scmp.eq.s32.totalorder %s23, 1
    %p224 = por %p222, %p223
    %p226 = scmp.ne.s32.totalorder %s211, %s225
    %p227 = scmp.eq.s32.totalorder %s23, 0
    %p228 = por %p226, %p227
    %s230 = sadd.s32 %s229, 1
    %p233 = scmp.eq.s32.totalorder %s17, 1
    %p234 = scmp.ne.s32.totalorder %s229, %s231
    %p235 = scmp.eq.s32.totalorder %s17, 0
    %p236 = por %p234, %p235
    %p237 = scmp.ne.s32.totalorder %s229, %s231
    %p238 = scmp.eq.s32.totalorder %s22, 1
    %p239 = por %p237, %p238
    %p240 = scmp.ne.s32.totalorder %s231, %s232
    %p241 = scmp.eq.s32.totalorder %s22, 0
    %p242 = por %p240, %p241
    %p243 = scmp.ne.s32.totalorder %s231, %s232
    %p244 = scmp.eq.s32.totalorder %s23, 1
    %p245 = por %p243, %p244
    %p247 = scmp.ne.s32.totalorder %s232, %s246
    %p248 = scmp.eq.s32.totalorder %s23, 0
    %p249 = por %p247, %p248
    %s251 = sadd.s32 %s250, 1
    %p254 = scmp.eq.s32.totalorder %s17, 1
    %p255 = scmp.ne.s32.totalorder %s250, %s252
    %p256 = scmp.eq.s32.totalorder %s17, 0
    %p257 = por %p255, %p256
    %p258 = scmp.ne.s32.totalorder %s250, %s252
    %p259 = scmp.eq.s32.totalorder %s22, 1
    %p260 = por %p258, %p259
    %p261 = scmp.ne.s32.totalorder %s252, %s253
    %p262 = scmp.eq.s32.totalorder %s22, 0
    %p263 = por %p261, %p262
    %p264 = scmp.ne.s32.totalorder %s252, %s253
    %p265 = scmp.eq.s32.totalorder %s23, 1
    %p266 = por %p264, %p265
    %p268 = scmp.ne.s32.totalorder %s253, %s267
    %p269 = scmp.eq.s32.totalorder %s23, 0
    %p270 = por %p268, %p269
    %s271 = ssub.s32 %s17, %s24
    %p272 = scmp.eq.s32.totalorder %s271, 0
    %s274 = sadd.s32 %s273, 1
    %s275 = scalar_select %p272, %s273, %s274
    %p278 = pneg %p272
    %p279 = scmp.eq.s32.totalorder %s17, 1
    %p280 = por %p278, %p279
    %p281 = scmp.ne.s32.totalorder %s273, %s276
    %p282 = scmp.eq.s32.totalorder %s17, 0
    %p283 = por %p281, %p282
    %p284 = scmp.ne.s32.totalorder %s273, %s276
    %p285 = scmp.eq.s32.totalorder %s22, 1
    %p286 = por %p284, %p285
    %p287 = scmp.ne.s32.totalorder %s276, %s277
    %p288 = scmp.eq.s32.totalorder %s22, 0
    %p289 = por %p287, %p288
    %p290 = scmp.ne.s32.totalorder %s276, %s277
    %p291 = scmp.eq.s32.totalorder %s23, 1
    %p292 = por %p290, %p291
    %p294 = scmp.ne.s32.totalorder %s277, %s293
    %p295 = scmp.eq.s32.totalorder %s23, 0
    %p296 = por %p294, %p295
    %p297 = scmp.le.s32.totalorder 1, %s17
    %p298 = scmp.lt.s32.totalorder %s17, 3
    %p299 = pnand %p297, %p298
    %p300 = pneg %p299
    // Predicated region
    $region9: #{decoder_layer.3} parent=5 // pred_check
      _
    $region10: #{decoder_layer.3} parent=5 // pred_check_branch
      %302 = sbr.rel (%p299) target = $region12
    $region11: #{decoder_layer.3} parent=5 // pred_region
      %s303 = ssub.s32 %s17, 1
      // Predicated region
      $region13: #{decoder_layer.3} parent=11 // pred_check
        %p304 = pneg %p116
      $region14: #{decoder_layer.3} parent=11 // pred_check_branch
        %306 = sbr.rel (%p304) target = $region16
      $region15: #{decoder_layer.3} parent=11 // pred_region
        _
      $region16: #{decoder_layer.3} parent=11 // pred_fallthru
        _
      // Predicated region
      $region17: #{decoder_layer.3} parent=11 // pred_check
        %p307 = pneg %p137
      $region18: #{decoder_layer.3} parent=11 // pred_check_branch
        %309 = sbr.rel (%p307) target = $region20
      $region19: #{decoder_layer.3} parent=11 // pred_region
        _
      $region20: #{decoder_layer.3} parent=11 // pred_fallthru
        _
      // Predicated region
      $region21: #{decoder_layer.3} parent=11 // pred_check
        %p310 = pneg %p158
      $region22: #{decoder_layer.3} parent=11 // pred_check_branch
        %312 = sbr.rel (%p310) target = $region24
      $region23: #{decoder_layer.3} parent=11 // pred_region
        _
      $region24: #{decoder_layer.3} parent=11 // pred_fallthru
        _
      // Predicated region
      $region25: #{decoder_layer.3} parent=11 // pred_check
        %p313 = pneg %p179
      $region26: #{decoder_layer.3} parent=11 // pred_check_branch
        %315 = sbr.rel (%p313) target = $region28
      $region27: #{decoder_layer.3} parent=11 // pred_region
        _
      $region28: #{decoder_layer.3} parent=11 // pred_fallthru
        _
      // Predicated region
      $region29: #{decoder_layer.3} parent=11 // pred_check
        %p316 = pneg %p200
      $region30: #{decoder_layer.3} parent=11 // pred_check_branch
        %318 = sbr.rel (%p316) target = $region32
      $region31: #{decoder_layer.3} parent=11 // pred_region
        _
      $region32: #{decoder_layer.3} parent=11 // pred_fallthru
        _
      // Predicated region
      $region33: #{decoder_layer.3} parent=11 // pred_check
        %p319 = pneg %p221
      $region34: #{decoder_layer.3} parent=11 // pred_check_branch
        %321 = sbr.rel (%p319) target = $region36
      $region35: #{decoder_layer.3} parent=11 // pred_region
        _
      $region36: #{decoder_layer.3} parent=11 // pred_fallthru
        _
      // Predicated region
      $region37: #{decoder_layer.3} parent=11 // pred_check
        %p322 = pneg %p242
      $region38: #{decoder_layer.3} parent=11 // pred_check_branch
        %324 = sbr.rel (%p322) target = $region40
      $region39: #{decoder_layer.3} parent=11 // pred_region
        _
      $region40: #{decoder_layer.3} parent=11 // pred_fallthru
        _
      // Predicated region
      $region41: #{decoder_layer.3} parent=11 // pred_check
        %p325 = pneg %p263
      $region42: #{decoder_layer.3} parent=11 // pred_check_branch
        %327 = sbr.rel (%p325) target = $region44
      $region43: #{decoder_layer.3} parent=11 // pred_region
        _
      $region44: #{decoder_layer.3} parent=11 // pred_fallthru
        _
    $region12: #{decoder_layer.3} parent=5 // pred_fallthru
      _
    %p328 = scmp.lt.s32.totalorder %s17, 2
    // Predicated region
    $region45: #{decoder_layer.3} parent=5 // pred_check
      %p329 = pneg %p328
    $region46: #{decoder_layer.3} parent=5 // pred_check_branch
      %331 = sbr.rel (%p329) target = $region48
    $region47: #{decoder_layer.3} parent=5 // pred_region
      // Predicated region
      $region49: #{decoder_layer.3} parent=47 // pred_check
        %p332 = pneg %p37
      $region50: #{decoder_layer.3} parent=47 // pred_check_branch
        %334 = sbr.rel (%p332) target = $region52
      $region51: #{decoder_layer.3} parent=47 // pred_region
        %p335 = scmp.lt.s32.totalorder %s17, 1
        %s336 = scalar_select %p335, %s17, 1
        %s337 = smul.addr %s336, 8
        %s338 = scalar_lea.vmem %s0, %s337
      $region52: #{decoder_layer.3} parent=47 // pred_fallthru
        _
      // Predicated region
      $region53: #{decoder_layer.3} parent=47 // pred_check
        %p339 = pneg %p63
      $region54: #{decoder_layer.3} parent=47 // pred_check_branch
        %341 = sbr.rel (%p339) target = $region56
      $region55: #{decoder_layer.3} parent=47 // pred_region
        %p342 = scmp.lt.s32.totalorder %s17, 1
        %s343 = scalar_select %p342, %s17, 1
        %s344 = smul.addr %s343, 8
        %s345 = scalar_lea.vmem %s1, %s344
      $region56: #{decoder_layer.3} parent=47 // pred_fallthru
        _
      // Predicated region
      $region57: #{decoder_layer.3} parent=47 // pred_check
        %p346 = pneg %p89
      $region58: #{decoder_layer.3} parent=47 // pred_check_branch
        %348 = sbr.rel (%p346) target = $region60
      $region59: #{decoder_layer.3} parent=47 // pred_region
        %p349 = scmp.lt.s32.totalorder %s17, 1
        %s350 = scalar_select %p349, %s17, 1
        %s351 = smul.addr %s350, 8
        %s352 = scalar_lea.vmem %s2, %s351
      $region60: #{decoder_layer.3} parent=47 // pred_fallthru
        _
    $region48: #{decoder_layer.3} parent=5 // pred_fallthru
      _
    %p353 = scmp.le.s32.totalorder 1, %s17
    %p354 = scmp.lt.s32.totalorder %s17, 3
    %p355 = pnand %p353, %p354
    %p356 = pneg %p355
    // Predicated region
    $region61: #{decoder_layer.3} parent=5 // pred_check
      _
    $region62: #{decoder_layer.3} parent=5 // pred_check_branch
      %358 = sbr.rel (%p355) target = $region64
    $region63: #{decoder_layer.3} parent=5 // pred_region
      %s359 = ssub.s32 %s17, 1
      %p360 = scmp.lt.s32.totalorder %s22, 1
      %s361 = scalar_select %p360, %s22, 1
      %s362 = smul.addr %s361, 8
      %s363 = scalar_lea.vmem %s0, %s362
      %p364 = pneg %p43
      %p365 = pneg %p40
      %p366 = scmp.lt.s32.totalorder %s22, 1
      %s367 = scalar_select %p366, %s22, 1
      %s368 = smul.addr %s367, 8
      %s369 = scalar_lea.vmem %s1, %s368
      %p370 = pneg %p69
      %p371 = pneg %p66
      %p372 = scmp.lt.s32.totalorder %s22, 1
      %s373 = scalar_select %p372, %s22, 1
      %s374 = smul.addr %s373, 8
      %s375 = scalar_lea.vmem %s2, %s374
      %p376 = pneg %p95
      %p377 = pneg %p92
      %p378 = pneg %p116
      %p379 = pneg %p113
      %p380 = pneg %p137
      %p381 = pneg %p134
      %p382 = pneg %p158
      %p383 = pneg %p155
      %p384 = pneg %p179
      %p385 = pneg %p176
      %p386 = pneg %p200
      %p387 = pneg %p197
      %p388 = pneg %p221
      %p389 = pneg %p218
      %p390 = pneg %p242
      %p391 = pneg %p239
      %p392 = pneg %p263
      %p393 = pneg %p260
      %p394 = pneg %p289
      %p395 = pneg %p286
      %p396 = scmp.lt.s32.totalorder %s22, 1
      %s397 = scalar_select %p396, %s22, 1
      %s398 = smul.addr %s397, 8
      %s399 = scalar_lea.vmem %s11, %s398
      %p400 = scmp.lt.s32.totalorder %s22, 1
      %s401 = scalar_select %p400, %s22, 1
      %s402 = smul.addr %s401, 8
      %s403 = scalar_lea.vmem %s0, %s402
      %p404 = scmp.lt.s32.totalorder %s22, 1
      %s405 = scalar_select %p404, %s22, 1
      %s406 = smul.addr %s405, 8
      %s407 = scalar_lea.vmem %s1, %s406
      %p408 = scmp.lt.s32.totalorder %s22, 1
      %s409 = scalar_select %p408, %s22, 1
      %s410 = smul.addr %s409, 8
      %s411 = scalar_lea.vmem %s2, %s410
      %p412 = scmp.lt.s32.totalorder %s22, 1
      %s413 = scalar_select %p412, %s22, 1
      %s414 = smul.addr %s413, 8
      %s415 = scalar_lea.vmem %s11, %s414
      %v417 = vld [vmem:[%s403] sm:$0xff]
      %v418 = vld [vmem:[%s407] sm:$0xff]
      %v419 = vld [vmem:[%s411] sm:$0xff]
      %v420 = vpack.c.bf16 %v417, %v417
      %v421 = vld [vmem:[%s3] sm:$0xf]
      %v422 = vld [vmem:[%s3 + $0x4] sm:$0xf]
      %v423 = vld [vmem:[%s3 + $0x8] sm:$0xf]
      %v424 = vld [vmem:[%s3 + $0xc] sm:$0xf]
      %v425 = vld [vmem:[%s4] sm:$0x1]
      %v427 = vlaneseq
      %v428 = vshrl.u32 %v427, 7
      %v429 = vsub.s32 0, %v428
      %v430 = vrot.slane %v425, %v429
      %v436 = vunpack.c.l.b16 %v421
      %v437 = vunpack.c.l.b16 %v422
      %v438 = vunpack.c.l.b16 %v423
      %v439 = vunpack.c.l.b16 %v424
      %v440 = vpack.c.b16 %v437, %v436
      %v441 = vpack.c.b16 %v439, %v438
      %vm444 = vcmask 261120
      %v446 = vsel %vm444, %v420, 0
      %448 = vmatprep.subr.bf16.mxu0 0
      %449 = vmatpush1.bf16.msra.mxu0 0
      %450 = vmatprep.subr.bf16.mxu0 0
      %451 = vmatpush1.bf16.msra.mxu0 0
      %452 = vmatprep.subr.bf16.mxu0 0
      %453 = vmatpush1.bf16.msra.mxu0 0
      %454 = vmatprep.subr.bf16.mxu0 0
      %455 = vmatpush1.bf16.msra.mxu0 0
      %456 = vmatprep.subr.bf16.mxu0 0
      %457 = vmatpush1.bf16.msra.mxu0 0
      %458 = vmatprep.subr.bf16.mxu0 0
      %459 = vmatpush1.bf16.msra.mxu0 0
      %460 = vmatprep.subr.bf16.mxu0 0
      %461 = vmatpush1.bf16.msra.mxu0 %v441
      %462 = vmatprep.subr.bf16.mxu0 0
      %463 = vmatpush1.bf16.msra.mxu0 %v440
      %464 = vmatprep.subr.bf16.mxu0 0
      %465 = vmatpush2.bf16.msra.mxu0 0
      %466 = vmatprep.subr.bf16.mxu0 0
      %467 = vmatpush2.bf16.msra.mxu0 0
      %468 = vmatprep.subr.bf16.mxu0 0
      %469 = vmatpush2.bf16.msra.mxu0 0
      %470 = vmatprep.subr.bf16.mxu0 0
      %471 = vmatpush2.bf16.msra.mxu0 0
      %472 = vmatprep.subr.bf16.mxu0 0
      %473 = vmatpush2.bf16.msra.mxu0 0
      %474 = vmatprep.subr.bf16.mxu0 0
      %475 = vmatpush2.bf16.msra.mxu0 0
      %476 = vmatprep.subr.bf16.mxu0 0
      %477 = vmatpush2.bf16.msra.mxu0 0
      %478 = vmatprep.subr.bf16.mxu0 0
      %479 = vmatpush2.bf16.msra.mxu0 0
      %480 = vmatprep.mubr.bf16.mxu0 0
      %481 = vmatmul.mubr.bf16.gmra.mxu0 %v446
      %v482 = vpop.f32.mrf.mxu0
      %v483 = vadd.f32 %v430, %v482
      %v484 = vpop.f32.mrf.mxu0
      %v485 = vpop.f32.mrf.mxu0
      %v486 = vpop.f32.mrf.mxu0
      %487 = vdwg.mxu0
      %v488 = vpack.c.bf16 %v418, %v418
      %v489 = vld [vmem:[%s5] sm:$0xf]
      %v490 = vld [vmem:[%s5 + $0x4] sm:$0xf]
      %v491 = vld [vmem:[%s5 + $0x8] sm:$0xf]
      %v492 = vld [vmem:[%s5 + $0xc] sm:$0xf]
      %v493 = vld [vmem:[%s6] sm:$0x1]
      %v495 = vlaneseq
      %v496 = vshrl.u32 %v495, 7
      %v497 = vsub.s32 0, %v496
      %v498 = vrot.slane %v493, %v497
      %v504 = vunpack.c.l.b16 %v489
      %v505 = vunpack.c.l.b16 %v490
      %v506 = vunpack.c.l.b16 %v491
      %v507 = vunpack.c.l.b16 %v492
      %v508 = vpack.c.b16 %v505, %v504
      %v509 = vpack.c.b16 %v507, %v506
      %v513 = vsel %vm444, %v488, 0
      %515 = vmatprep.subr.bf16.mxu0 0
      %516 = vmatpush1.bf16.msra.mxu0 0
      %517 = vmatprep.subr.bf16.mxu0 0
      %518 = vmatpush1.bf16.msra.mxu0 0
      %519 = vmatprep.subr.bf16.mxu0 0
      %520 = vmatpush1.bf16.msra.mxu0 0
      %521 = vmatprep.subr.bf16.mxu0 0
      %522 = vmatpush1.bf16.msra.mxu0 0
      %523 = vmatprep.subr.bf16.mxu0 0
      %524 = vmatpush1.bf16.msra.mxu0 0
      %525 = vmatprep.subr.bf16.mxu0 0
      %526 = vmatpush1.bf16.msra.mxu0 0
      %527 = vmatprep.subr.bf16.mxu0 0
      %528 = vmatpush1.bf16.msra.mxu0 %v509
      %529 = vmatprep.subr.bf16.mxu0 0
      %530 = vmatpush1.bf16.msra.mxu0 %v508
      %531 = vmatprep.subr.bf16.mxu0 0
      %532 = vmatpush2.bf16.msra.mxu0 0
      %533 = vmatprep.subr.bf16.mxu0 0
      %534 = vmatpush2.bf16.msra.mxu0 0
      %535 = vmatprep.subr.bf16.mxu0 0
      %536 = vmatpush2.bf16.msra.mxu0 0
      %537 = vmatprep.subr.bf16.mxu0 0
      %538 = vmatpush2.bf16.msra.mxu0 0
      %539 = vmatprep.subr.bf16.mxu0 0
      %540 = vmatpush2.bf16.msra.mxu0 0
      %541 = vmatprep.subr.bf16.mxu0 0
      %542 = vmatpush2.bf16.msra.mxu0 0
      %543 = vmatprep.subr.bf16.mxu0 0
      %544 = vmatpush2.bf16.msra.mxu0 0
      %545 = vmatprep.subr.bf16.mxu0 0
      %546 = vmatpush2.bf16.msra.mxu0 0
      %547 = vmatprep.mubr.bf16.mxu0 0
      %548 = vmatmul.mubr.bf16.gmra.mxu0 %v513
      %v549 = vpop.f32.mrf.mxu0
      %v550 = vadd.f32 %v498, %v549
      %v551 = vpop.f32.mrf.mxu0
      %v552 = vpop.f32.mrf.mxu0
      %v553 = vpop.f32.mrf.mxu0
      %554 = vdwg.mxu0
      %v555 = vld [vmem:[%s7] sm:$0xff]
      %v556 = vld [vmem:[%s7 + $0x8] sm:$0xff]
      %v557 = vld [vmem:[%s7 + $0x10] sm:$0xff]
      %v558 = vld [vmem:[%s7 + $0x18] sm:$0xff]
      %v559 = vpack.c.bf16 %v483, %v483
      %v560 = vpack.c.bf16 %v550, %v550
      %vm561 = vcmask 64512
      %v563 = vsel %vm561, %v559, 0
      %v566 = vsel %vm561, %v560, 0
      %568 = vmatprep.subr.bf16.mxu0 0
      %569 = vmatpush1.bf16.xpose.msra.mxu0 0
      %570 = vmatprep.subr.bf16.mxu0 0
      %571 = vmatpush1.bf16.xpose.msra.mxu0 0
      %572 = vmatprep.subr.bf16.mxu0 0
      %573 = vmatpush1.bf16.xpose.msra.mxu0 0
      %574 = vmatprep.subr.bf16.mxu0 0
      %575 = vmatpush1.bf16.xpose.msra.mxu0 0
      %576 = vmatprep.subr.bf16.mxu0 0
      %577 = vmatpush1.bf16.xpose.msra.mxu0 0
      %578 = vmatprep.subr.bf16.mxu0 0
      %579 = vmatpush1.bf16.xpose.msra.mxu0 0
      %580 = vmatprep.subr.bf16.mxu0 0
      %581 = vmatpush1.bf16.xpose.msra.mxu0 0
      %582 = vmatprep.subr.bf16.mxu0 0
      %583 = vmatpush1.bf16.xpose.msra.mxu0 %v566
      %584 = vmatprep.subr.bf16.mxu0 0
      %585 = vmatpush2.bf16.xpose.msra.mxu0 0
      %586 = vmatprep.subr.bf16.mxu0 0
      %587 = vmatpush2.bf16.xpose.msra.mxu0 0
      %588 = vmatprep.subr.bf16.mxu0 0
      %589 = vmatpush2.bf16.xpose.msra.mxu0 0
      %590 = vmatprep.subr.bf16.mxu0 0
      %591 = vmatpush2.bf16.xpose.msra.mxu0 0
      %592 = vmatprep.subr.bf16.mxu0 0
      %593 = vmatpush2.bf16.xpose.msra.mxu0 0
      %594 = vmatprep.subr.bf16.mxu0 0
      %595 = vmatpush2.bf16.xpose.msra.mxu0 0
      %596 = vmatprep.subr.bf16.mxu0 0
      %597 = vmatpush2.bf16.xpose.msra.mxu0 0
      %598 = vmatprep.subr.bf16.mxu0 0
      %599 = vmatpush2.bf16.xpose.msra.mxu0 0
      %600 = vmatprep.mubr.bf16.mxu0 0
      %601 = vmatmul.mubr.bf16.gmra.mxu0 %v563
      %v602 = vpop.f32.mrf.mxu0
      %v603 = vadd.f32 0.0, %v602
      %v604 = vpop.f32.mrf.mxu0
      %v605 = vpop.f32.mrf.mxu0
      %v606 = vpop.f32.mrf.mxu0
      %607 = vdwg.mxu0
      %v608 = vmul.f32 %v603, 0.35355338
      %vm609 = vcmp.gt.f32.partialorder %v419, 0.0
      %v610 = vsel %vm609, %v608, -1e+09
      %v611 = vsel %vm561, %v610, -inf
      %612 = vmax.xlane.f32.xlu0 %v611
      %v613 = vpop.xlane.xlu0 %612
      %v614 = vsub.f32 %v610, %v613
      %v615 = vmul.f32 %v614, 1.442695
      %v616 = vpow.pop %v615
      %v617 = vsel %vm561, %v616, 0.0
      %618 = vadd.xlane.f32.xlu0 %v617
      %v619 = vpop.xlane.xlu0 %618
      %v620 = vrcp.pop %v619
      %v621 = vmul.f32 %v616, %v620
      %v622 = vpack.c.bf16 %v621, %v621
      %624 = vrot.lane.b32.xlu0 %v560, 96
      %v625 = vpop.permute.xlu0 %624
      %v627 = vsel %vm561, %v622, 0
      %vm629 = vcmask 1043456
      %v631 = vsel %vm629, %v625, 0
      %633 = vmatprep.subr.bf16.mxu0 0
      %634 = vmatpush1.bf16.msra.mxu0 0
      %635 = vmatprep.subr.bf16.mxu0 0
      %636 = vmatpush1.bf16.msra.mxu0 0
      %637 = vmatprep.subr.bf16.mxu0 0
      %638 = vmatpush1.bf16.msra.mxu0 0
      %639 = vmatprep.subr.bf16.mxu0 0
      %640 = vmatpush1.bf16.msra.mxu0 0
      %641 = vmatprep.subr.bf16.mxu0 0
      %642 = vmatpush1.bf16.msra.mxu0 0
      %643 = vmatprep.subr.bf16.mxu0 0
      %644 = vmatpush1.bf16.msra.mxu0 0
      %645 = vmatprep.subr.bf16.mxu0 0
      %646 = vmatpush1.bf16.msra.mxu0 0
      %647 = vmatprep.subr.bf16.mxu0 0
      %648 = vmatpush1.bf16.msra.mxu0 %v631
      %649 = vmatprep.subr.bf16.mxu0 0
      %650 = vmatpush2.bf16.msra.mxu0 0
      %651 = vmatprep.subr.bf16.mxu0 0
      %652 = vmatpush2.bf16.msra.mxu0 0
      %653 = vmatprep.subr.bf16.mxu0 0
      %654 = vmatpush2.bf16.msra.mxu0 0
      %655 = vmatprep.subr.bf16.mxu0 0
      %656 = vmatpush2.bf16.msra.mxu0 0
      %657 = vmatprep.subr.bf16.mxu0 0
      %658 = vmatpush2.bf16.msra.mxu0 0
      %659 = vmatprep.subr.bf16.mxu0 0
      %660 = vmatpush2.bf16.msra.mxu0 0
      %661 = vmatprep.subr.bf16.mxu0 0
      %662 = vmatpush2.bf16.msra.mxu0 0
      %663 = vmatprep.subr.bf16.mxu0 0
      %664 = vmatpush2.bf16.msra.mxu0 0
      %665 = vmatprep.mubr.bf16.mxu0 0
      %666 = vmatmul.mubr.bf16.gmra.mxu0 %v627
      %v667 = vpop.f32.mrf.mxu0
      %v668 = vadd.f32 0.0, %v667
      %v669 = vpop.f32.mrf.mxu0
      %v670 = vpop.f32.mrf.mxu0
      %v671 = vpop.f32.mrf.mxu0
      %672 = vdwg.mxu0
      %v673 = vpack.c.bf16 %v668, %v668
      %v674 = vpack.c.bf16 %v555, %v555
      %676 = vrot.lane.b32.xlu0 %v559, 120
      %v677 = vpop.permute.xlu0 %676
      %678 = vrot.lane.b32.xlu0 %v560, 120
      %v679 = vpop.permute.xlu0 %678
      %v681 = vsel %vm561, %v677, 0
      %v684 = vsel %vm561, %v679, 0
      %686 = vmatprep.subr.bf16.mxu0 0
      %687 = vmatpush1.bf16.xpose.msra.mxu0 0
      %688 = vmatprep.subr.bf16.mxu0 0
      %689 = vmatpush1.bf16.xpose.msra.mxu0 0
      %690 = vmatprep.subr.bf16.mxu0 0
      %691 = vmatpush1.bf16.xpose.msra.mxu0 0
      %692 = vmatprep.subr.bf16.mxu0 0
      %693 = vmatpush1.bf16.xpose.msra.mxu0 0
      %694 = vmatprep.subr.bf16.mxu0 0
      %695 = vmatpush1.bf16.xpose.msra.mxu0 0
      %696 = vmatprep.subr.bf16.mxu0 0
      %697 = vmatpush1.bf16.xpose.msra.mxu0 0
      %698 = vmatprep.subr.bf16.mxu0 0
      %699 = vmatpush1.bf16.xpose.msra.mxu0 0
      %700 = vmatprep.subr.bf16.mxu0 0
      %701 = vmatpush1.bf16.xpose.msra.mxu0 %v684
      %702 = vmatprep.subr.bf16.mxu0 0
      %703 = vmatpush2.bf16.xpose.msra.mxu0 0
      %704 = vmatprep.subr.bf16.mxu0 0
      %705 = vmatpush2.bf16.xpose.msra.mxu0 0
      %706 = vmatprep.subr.bf16.mxu0 0
      %707 = vmatpush2.bf16.xpose.msra.mxu0 0
      %708 = vmatprep.subr.bf16.mxu0 0
      %709 = vmatpush2.bf16.xpose.msra.mxu0 0
      %710 = vmatprep.subr.bf16.mxu0 0
      %711 = vmatpush2.bf16.xpose.msra.mxu0 0
      %712 = vmatprep.subr.bf16.mxu0 0
      %713 = vmatpush2.bf16.xpose.msra.mxu0 0
      %714 = vmatprep.subr.bf16.mxu0 0
      %715 = vmatpush2.bf16.xpose.msra.mxu0 0
      %716 = vmatprep.subr.bf16.mxu0 0
      %717 = vmatpush2.bf16.xpose.msra.mxu0 0
      %718 = vmatprep.mubr.bf16.mxu0 0
      %719 = vmatmul.mubr.bf16.gmra.mxu0 %v681
      %v720 = vpop.f32.mrf.mxu0
      %v721 = vadd.f32 0.0, %v720
      %v722 = vpop.f32.mrf.mxu0
      %v723 = vpop.f32.mrf.mxu0
      %v724 = vpop.f32.mrf.mxu0
      %725 = vdwg.mxu0
      %v726 = vmul.f32 %v721, 0.35355338
      %v727 = vsel %vm609, %v726, -1e+09
      %v728 = vsel %vm561, %v727, -inf
      %729 = vmax.xlane.f32.xlu0 %v728
      %v730 = vpop.xlane.xlu0 %729
      %v731 = vsub.f32 %v727, %v730
      %v732 = vmul.f32 %v731, 1.442695
      %v733 = vpow.pop %v732
      %v734 = vsel %vm561, %v733, 0.0
      %735 = vadd.xlane.f32.xlu0 %v734
      %v736 = vpop.xlane.xlu0 %735
      %v737 = vrcp.pop %v736
      %v738 = vmul.f32 %v733, %v737
      %v739 = vpack.c.bf16 %v738, %v738
      %740 = vrot.lane.b32.xlu0 %v560, 88
      %v741 = vpop.permute.xlu0 %740
      %v743 = vsel %vm561, %v739, 0
      %v746 = vsel %vm629, %v741, 0
      %748 = vmatprep.subr.bf16.mxu0 0
      %749 = vmatpush1.bf16.msra.mxu0 0
      %750 = vmatprep.subr.bf16.mxu0 0
      %751 = vmatpush1.bf16.msra.mxu0 0
      %752 = vmatprep.subr.bf16.mxu0 0
      %753 = vmatpush1.bf16.msra.mxu0 0
      %754 = vmatprep.subr.bf16.mxu0 0
      %755 = vmatpush1.bf16.msra.mxu0 0
      %756 = vmatprep.subr.bf16.mxu0 0
      %757 = vmatpush1.bf16.msra.mxu0 0
      %758 = vmatprep.subr.bf16.mxu0 0
      %759 = vmatpush1.bf16.msra.mxu0 0
      %760 = vmatprep.subr.bf16.mxu0 0
      %761 = vmatpush1.bf16.msra.mxu0 0
      %762 = vmatprep.subr.bf16.mxu0 0
      %763 = vmatpush1.bf16.msra.mxu0 %v746
      %764 = vmatprep.subr.bf16.mxu0 0
      %765 = vmatpush2.bf16.msra.mxu0 0
      %766 = vmatprep.subr.bf16.mxu0 0
      %767 = vmatpush2.bf16.msra.mxu0 0
      %768 = vmatprep.subr.bf16.mxu0 0
      %769 = vmatpush2.bf16.msra.mxu0 0
      %770 = vmatprep.subr.bf16.mxu0 0
      %771 = vmatpush2.bf16.msra.mxu0 0
      %772 = vmatprep.subr.bf16.mxu0 0
      %773 = vmatpush2.bf16.msra.mxu0 0
      %774 = vmatprep.subr.bf16.mxu0 0
      %775 = vmatpush2.bf16.msra.mxu0 0
      %776 = vmatprep.subr.bf16.mxu0 0
      %777 = vmatpush2.bf16.msra.mxu0 0
      %778 = vmatprep.subr.bf16.mxu0 0
      %779 = vmatpush2.bf16.msra.mxu0 0
      %780 = vmatprep.mubr.bf16.mxu0 0
      %781 = vmatmul.mubr.bf16.gmra.mxu0 %v743
      %v782 = vpop.f32.mrf.mxu0
      %v783 = vadd.f32 0.0, %v782
      %v784 = vpop.f32.mrf.mxu0
      %v785 = vpop.f32.mrf.mxu0
      %v786 = vpop.f32.mrf.mxu0
      %787 = vdwg.mxu0
      %v788 = vpack.c.bf16 %v783, %v783
      %v789 = vpack.c.bf16 %v556, %v556
      %v791 = vsel %vm561, %v788, 0
      %v794 = vsel %vm629, %v789, 0
      %796 = vmatprep.subr.bf16.mxu0 0
      %797 = vmatpush1.bf16.msra.mxu0 0
      %798 = vmatprep.subr.bf16.mxu0 0
      %799 = vmatpush1.bf16.msra.mxu0 0
      %800 = vmatprep.subr.bf16.mxu0 0
      %801 = vmatpush1.bf16.msra.mxu0 0
      %802 = vmatprep.subr.bf16.mxu0 0
      %803 = vmatpush1.bf16.msra.mxu0 0
      %804 = vmatprep.subr.bf16.mxu0 0
      %805 = vmatpush1.bf16.msra.mxu0 0
      %806 = vmatprep.subr.bf16.mxu0 0
      %807 = vmatpush1.bf16.msra.mxu0 0
      %808 = vmatprep.subr.bf16.mxu0 0
      %809 = vmatpush1.bf16.msra.mxu0 0
      %810 = vmatprep.subr.bf16.mxu0 0
      %811 = vmatpush1.bf16.msra.mxu0 %v794
      %812 = vmatprep.subr.bf16.mxu0 0
      %813 = vmatpush2.bf16.msra.mxu0 0
      %814 = vmatprep.subr.bf16.mxu0 0
      %815 = vmatpush2.bf16.msra.mxu0 0
      %816 = vmatprep.subr.bf16.mxu0 0
      %817 = vmatpush2.bf16.msra.mxu0 0
      %818 = vmatprep.subr.bf16.mxu0 0
      %819 = vmatpush2.bf16.msra.mxu0 0
      %820 = vmatprep.subr.bf16.mxu0 0
      %821 = vmatpush2.bf16.msra.mxu0 0
      %822 = vmatprep.subr.bf16.mxu0 0
      %823 = vmatpush2.bf16.msra.mxu0 0
      %824 = vmatprep.subr.bf16.mxu0 0
      %825 = vmatpush2.bf16.msra.mxu0 0
      %826 = vmatprep.subr.bf16.mxu0 0
      %827 = vmatpush2.bf16.msra.mxu0 0
      %828 = vmatprep.mubr.bf16.mxu0 0
      %829 = vmatmul.mubr.bf16.gmra.mxu0 %v791
      %v830 = vpop.f32.mrf.mxu0
      %v831 = vadd.f32 0.0, %v830
      %v832 = vpop.f32.mrf.mxu0
      %v833 = vpop.f32.mrf.mxu0
      %v834 = vpop.f32.mrf.mxu0
      %835 = vdwg.mxu0
      %v837 = vsel %vm561, %v673, 0
      %v840 = vsel %vm629, %v674, 0
      %842 = vmatprep.subr.bf16.mxu0 0
      %843 = vmatpush1.bf16.msra.mxu0 0
      %844 = vmatprep.subr.bf16.mxu0 0
      %845 = vmatpush1.bf16.msra.mxu0 0
      %846 = vmatprep.subr.bf16.mxu0 0
      %847 = vmatpush1.bf16.msra.mxu0 0
      %848 = vmatprep.subr.bf16.mxu0 0
      %849 = vmatpush1.bf16.msra.mxu0 0
      %850 = vmatprep.subr.bf16.mxu0 0
      %851 = vmatpush1.bf16.msra.mxu0 0
      %852 = vmatprep.subr.bf16.mxu0 0
      %853 = vmatpush1.bf16.msra.mxu0 0
      %854 = vmatprep.subr.bf16.mxu0 0
      %855 = vmatpush1.bf16.msra.mxu0 0
      %856 = vmatprep.subr.bf16.mxu0 0
      %857 = vmatpush1.bf16.msra.mxu0 %v840
      %858 = vmatprep.subr.bf16.mxu0 0
      %859 = vmatpush2.bf16.msra.mxu0 0
      %860 = vmatprep.subr.bf16.mxu0 0
      %861 = vmatpush2.bf16.msra.mxu0 0
      %862 = vmatprep.subr.bf16.mxu0 0
      %863 = vmatpush2.bf16.msra.mxu0 0
      %864 = vmatprep.subr.bf16.mxu0 0
      %865 = vmatpush2.bf16.msra.mxu0 0
      %866 = vmatprep.subr.bf16.mxu0 0
      %867 = vmatpush2.bf16.msra.mxu0 0
      %868 = vmatprep.subr.bf16.mxu0 0
      %869 = vmatpush2.bf16.msra.mxu0 0
      %870 = vmatprep.subr.bf16.mxu0 0
      %871 = vmatpush2.bf16.msra.mxu0 0
      %872 = vmatprep.subr.bf16.mxu0 0
      %873 = vmatpush2.bf16.msra.mxu0 0
      %874 = vmatprep.mubr.bf16.mxu0 0
      %875 = vmatmul.mubr.bf16.gmra.mxu0 %v837
      %v876 = vpop.f32.mrf.mxu0
      %v877 = vadd.f32 %v831, %v876
      %v878 = vpop.f32.mrf.mxu0
      %v879 = vpop.f32.mrf.mxu0
      %v880 = vpop.f32.mrf.mxu0
      %881 = vdwg.mxu0
      %882 = vrot.lane.b32.xlu0 %v559, 112
      %v883 = vpop.permute.xlu0 %882
      %884 = vrot.lane.b32.xlu0 %v560, 112
      %v885 = vpop.permute.xlu0 %884
      %v887 = vsel %vm561, %v883, 0
      %v890 = vsel %vm561, %v885, 0
      %892 = vmatprep.subr.bf16.mxu0 0
      %893 = vmatpush1.bf16.xpose.msra.mxu0 0
      %894 = vmatprep.subr.bf16.mxu0 0
      %895 = vmatpush1.bf16.xpose.msra.mxu0 0
      %896 = vmatprep.subr.bf16.mxu0 0
      %897 = vmatpush1.bf16.xpose.msra.mxu0 0
      %898 = vmatprep.subr.bf16.mxu0 0
      %899 = vmatpush1.bf16.xpose.msra.mxu0 0
      %900 = vmatprep.subr.bf16.mxu0 0
      %901 = vmatpush1.bf16.xpose.msra.mxu0 0
      %902 = vmatprep.subr.bf16.mxu0 0
      %903 = vmatpush1.bf16.xpose.msra.mxu0 0
      %904 = vmatprep.subr.bf16.mxu0 0
      %905 = vmatpush1.bf16.xpose.msra.mxu0 0
      %906 = vmatprep.subr.bf16.mxu0 0
      %907 = vmatpush1.bf16.xpose.msra.mxu0 %v890
      %908 = vmatprep.subr.bf16.mxu0 0
      %909 = vmatpush2.bf16.xpose.msra.mxu0 0
      %910 = vmatprep.subr.bf16.mxu0 0
      %911 = vmatpush2.bf16.xpose.msra.mxu0 0
      %912 = vmatprep.subr.bf16.mxu0 0
      %913 = vmatpush2.bf16.xpose.msra.mxu0 0
      %914 = vmatprep.subr.bf16.mxu0 0
      %915 = vmatpush2.bf16.xpose.msra.mxu0 0
      %916 = vmatprep.subr.bf16.mxu0 0
      %917 = vmatpush2.bf16.xpose.msra.mxu0 0
      %918 = vmatprep.subr.bf16.mxu0 0
      %919 = vmatpush2.bf16.xpose.msra.mxu0 0
      %920 = vmatprep.subr.bf16.mxu0 0
      %921 = vmatpush2.bf16.xpose.msra.mxu0 0
      %922 = vmatprep.subr.bf16.mxu0 0
      %923 = vmatpush2.bf16.xpose.msra.mxu0 0
      %924 = vmatprep.mubr.bf16.mxu0 0
      %925 = vmatmul.mubr.bf16.gmra.mxu0 %v887
      %v926 = vpop.f32.mrf.mxu0
      %v927 = vadd.f32 0.0, %v926
      %v928 = vpop.f32.mrf.mxu0
      %v929 = vpop.f32.mrf.mxu0
      %v930 = vpop.f32.mrf.mxu0
      %931 = vdwg.mxu0
      %v932 = vmul.f32 %v927, 0.35355338
      %v933 = vsel %vm609, %v932, -1e+09
      %v934 = vsel %vm561, %v933, -inf
      %935 = vmax.xlane.f32.xlu0 %v934
      %v936 = vpop.xlane.xlu0 %935
      %v937 = vsub.f32 %v933, %v936
      %v938 = vmul.f32 %v937, 1.442695
      %v939 = vpow.pop %v938
      %v940 = vsel %vm561, %v939, 0.0
      %941 = vadd.xlane.f32.xlu0 %v940
      %v942 = vpop.xlane.xlu0 %941
      %v943 = vrcp.pop %v942
      %v944 = vmul.f32 %v939, %v943
      %v945 = vpack.c.bf16 %v944, %v944
      %946 = vrot.lane.b32.xlu0 %v560, 80
      %v947 = vpop.permute.xlu0 %946
      %v949 = vsel %vm561, %v945, 0
      %v952 = vsel %vm629, %v947, 0
      %954 = vmatprep.subr.bf16.mxu0 0
      %955 = vmatpush1.bf16.msra.mxu0 0
      %956 = vmatprep.subr.bf16.mxu0 0
      %957 = vmatpush1.bf16.msra.mxu0 0
      %958 = vmatprep.subr.bf16.mxu0 0
      %959 = vmatpush1.bf16.msra.mxu0 0
      %960 = vmatprep.subr.bf16.mxu0 0
      %961 = vmatpush1.bf16.msra.mxu0 0
      %962 = vmatprep.subr.bf16.mxu0 0
      %963 = vmatpush1.bf16.msra.mxu0 0
      %964 = vmatprep.subr.bf16.mxu0 0
      %965 = vmatpush1.bf16.msra.mxu0 0
      %966 = vmatprep.subr.bf16.mxu0 0
      %967 = vmatpush1.bf16.msra.mxu0 0
      %968 = vmatprep.subr.bf16.mxu0 0
      %969 = vmatpush1.bf16.msra.mxu0 %v952
      %970 = vmatprep.subr.bf16.mxu0 0
      %971 = vmatpush2.bf16.msra.mxu0 0
      %972 = vmatprep.subr.bf16.mxu0 0
      %973 = vmatpush2.bf16.msra.mxu0 0
      %974 = vmatprep.subr.bf16.mxu0 0
      %975 = vmatpush2.bf16.msra.mxu0 0
      %976 = vmatprep.subr.bf16.mxu0 0
      %977 = vmatpush2.bf16.msra.mxu0 0
      %978 = vmatprep.subr.bf16.mxu0 0
      %979 = vmatpush2.bf16.msra.mxu0 0
      %980 = vmatprep.subr.bf16.mxu0 0
      %981 = vmatpush2.bf16.msra.mxu0 0
      %982 = vmatprep.subr.bf16.mxu0 0
      %983 = vmatpush2.bf16.msra.mxu0 0
      %984 = vmatprep.subr.bf16.mxu0 0
      %985 = vmatpush2.bf16.msra.mxu0 0
      %986 = vmatprep.mubr.bf16.mxu0 0
      %987 = vmatmul.mubr.bf16.gmra.mxu0 %v949
      %v988 = vpop.f32.mrf.mxu0
      %v989 = vadd.f32 0.0, %v988
      %v990 = vpop.f32.mrf.mxu0
      %v991 = vpop.f32.mrf.mxu0
      %v992 = vpop.f32.mrf.mxu0
      %993 = vdwg.mxu0
      %v994 = vpack.c.bf16 %v989, %v989
      %v995 = vpack.c.bf16 %v557, %v557
      %v997 = vsel %vm561, %v994, 0
      %v1000 = vsel %vm629, %v995, 0
      %1002 = vmatprep.subr.bf16.mxu0 0
      %1003 = vmatpush1.bf16.msra.mxu0 0
      %1004 = vmatprep.subr.bf16.mxu0 0
      %1005 = vmatpush1.bf16.msra.mxu0 0
      %1006 = vmatprep.subr.bf16.mxu0 0
      %1007 = vmatpush1.bf16.msra.mxu0 0
      %1008 = vmatprep.subr.bf16.mxu0 0
      %1009 = vmatpush1.bf16.msra.mxu0 0
      %1010 = vmatprep.subr.bf16.mxu0 0
      %1011 = vmatpush1.bf16.msra.mxu0 0
      %1012 = vmatprep.subr.bf16.mxu0 0
      %1013 = vmatpush1.bf16.msra.mxu0 0
      %1014 = vmatprep.subr.bf16.mxu0 0
      %1015 = vmatpush1.bf16.msra.mxu0 0
      %1016 = vmatprep.subr.bf16.mxu0 0
      %1017 = vmatpush1.bf16.msra.mxu0 %v1000
      %1018 = vmatprep.subr.bf16.mxu0 0
      %1019 = vmatpush2.bf16.msra.mxu0 0
      %1020 = vmatprep.subr.bf16.mxu0 0
      %1021 = vmatpush2.bf16.msra.mxu0 0
      %1022 = vmatprep.subr.bf16.mxu0 0
      %1023 = vmatpush2.bf16.msra.mxu0 0
      %1024 = vmatprep.subr.bf16.mxu0 0
      %1025 = vmatpush2.bf16.msra.mxu0 0
      %1026 = vmatprep.subr.bf16.mxu0 0
      %1027 = vmatpush2.bf16.msra.mxu0 0
      %1028 = vmatprep.subr.bf16.mxu0 0
      %1029 = vmatpush2.bf16.msra.mxu0 0
      %1030 = vmatprep.subr.bf16.mxu0 0
      %1031 = vmatpush2.bf16.msra.mxu0 0
      %1032 = vmatprep.subr.bf16.mxu0 0
      %1033 = vmatpush2.bf16.msra.mxu0 0
      %1034 = vmatprep.mubr.bf16.mxu0 0
      %1035 = vmatmul.mubr.bf16.gmra.mxu0 %v997
      %v1036 = vpop.f32.mrf.mxu0
      %v1037 = vadd.f32 0.0, %v1036
      %v1038 = vpop.f32.mrf.mxu0
      %v1039 = vpop.f32.mrf.mxu0
      %v1040 = vpop.f32.mrf.mxu0
      %1041 = vdwg.mxu0
      %v1042 = vadd.f32 %v877, %v1037
      %1043 = vrot.lane.b32.xlu0 %v559, 104
      %v1044 = vpop.permute.xlu0 %1043
      %1045 = vrot.lane.b32.xlu0 %v560, 104
      %v1046 = vpop.permute.xlu0 %1045
      %v1048 = vsel %vm561, %v1044, 0
      %v1051 = vsel %vm561, %v1046, 0
      %1053 = vmatprep.subr.bf16.mxu0 0
      %1054 = vmatpush1.bf16.xpose.msra.mxu0 0
      %1055 = vmatprep.subr.bf16.mxu0 0
      %1056 = vmatpush1.bf16.xpose.msra.mxu0 0
      %1057 = vmatprep.subr.bf16.mxu0 0
      %1058 = vmatpush1.bf16.xpose.msra.mxu0 0
      %1059 = vmatprep.subr.bf16.mxu0 0
      %1060 = vmatpush1.bf16.xpose.msra.mxu0 0
      %1061 = vmatprep.subr.bf16.mxu0 0
      %1062 = vmatpush1.bf16.xpose.msra.mxu0 0
      %1063 = vmatprep.subr.bf16.mxu0 0
      %1064 = vmatpush1.bf16.xpose.msra.mxu0 0
      %1065 = vmatprep.subr.bf16.mxu0 0
      %1066 = vmatpush1.bf16.xpose.msra.mxu0 0
      %1067 = vmatprep.subr.bf16.mxu0 0
      %1068 = vmatpush1.bf16.xpose.msra.mxu0 %v1051
      %1069 = vmatprep.subr.bf16.mxu0 0
      %1070 = vmatpush2.bf16.xpose.msra.mxu0 0
      %1071 = vmatprep.subr.bf16.mxu0 0
      %1072 = vmatpush2.bf16.xpose.msra.mxu0 0
      %1073 = vmatprep.subr.bf16.mxu0 0
      %1074 = vmatpush2.bf16.xpose.msra.mxu0 0
      %1075 = vmatprep.subr.bf16.mxu0 0
      %1076 = vmatpush2.bf16.xpose.msra.mxu0 0
      %1077 = vmatprep.subr.bf16.mxu0 0
      %1078 = vmatpush2.bf16.xpose.msra.mxu0 0
      %1079 = vmatprep.subr.bf16.mxu0 0
      %1080 = vmatpush2.bf16.xpose.msra.mxu0 0
      %1081 = vmatprep.subr.bf16.mxu0 0
      %1082 = vmatpush2.bf16.xpose.msra.mxu0 0
      %1083 = vmatprep.subr.bf16.mxu0 0
      %1084 = vmatpush2.bf16.xpose.msra.mxu0 0
      %1085 = vmatprep.mubr.bf16.mxu0 0
      %1086 = vmatmul.mubr.bf16.gmra.mxu0 %v1048
      %v1087 = vpop.f32.mrf.mxu0
      %v1088 = vadd.f32 0.0, %v1087
      %v1089 = vpop.f32.mrf.mxu0
      %v1090 = vpop.f32.mrf.mxu0
      %v1091 = vpop.f32.mrf.mxu0
      %1092 = vdwg.mxu0
      %v1093 = vmul.f32 %v1088, 0.35355338
      %v1094 = vsel %vm609, %v1093, -1e+09
      %v1095 = vsel %vm561, %v1094, -inf
      %1096 = vmax.xlane.f32.xlu0 %v1095
      %v1097 = vpop.xlane.xlu0 %1096
      %v1098 = vsub.f32 %v1094, %v1097
      %v1099 = vmul.f32 %v1098, 1.442695
      %v1100 = vpow.pop %v1099
      %v1101 = vsel %vm561, %v1100, 0.0
      %1102 = vadd.xlane.f32.xlu0 %v1101
      %v1103 = vpop.xlane.xlu0 %1102
      %v1104 = vrcp.pop %v1103
      %v1105 = vmul.f32 %v1100, %v1104
      %v1106 = vpack.c.bf16 %v1105, %v1105
      %1107 = vrot.lane.b32.xlu0 %v560, 72
      %v1108 = vpop.permute.xlu0 %1107
      %v1110 = vsel %vm561, %v1106, 0
      %v1113 = vsel %vm629, %v1108, 0
      %1115 = vmatprep.subr.bf16.mxu0 0
      %1116 = vmatpush1.bf16.msra.mxu0 0
      %1117 = vmatprep.subr.bf16.mxu0 0
      %1118 = vmatpush1.bf16.msra.mxu0 0
      %1119 = vmatprep.subr.bf16.mxu0 0
      %1120 = vmatpush1.bf16.msra.mxu0 0
      %1121 = vmatprep.subr.bf16.mxu0 0
      %1122 = vmatpush1.bf16.msra.mxu0 0
      %1123 = vmatprep.subr.bf16.mxu0 0
      %1124 = vmatpush1.bf16.msra.mxu0 0
      %1125 = vmatprep.subr.bf16.mxu0 0
      %1126 = vmatpush1.bf16.msra.mxu0 0
      %1127 = vmatprep.subr.bf16.mxu0 0
      %1128 = vmatpush1.bf16.msra.mxu0 0
      %1129 = vmatprep.subr.bf16.mxu0 0
      %1130 = vmatpush1.bf16.msra.mxu0 %v1113
      %1131 = vmatprep.subr.bf16.mxu0 0
      %1132 = vmatpush2.bf16.msra.mxu0 0
      %1133 = vmatprep.subr.bf16.mxu0 0
      %1134 = vmatpush2.bf16.msra.mxu0 0
      %1135 = vmatprep.subr.bf16.mxu0 0
      %1136 = vmatpush2.bf16.msra.mxu0 0
      %1137 = vmatprep.subr.bf16.mxu0 0
      %1138 = vmatpush2.bf16.msra.mxu0 0
      %1139 = vmatprep.subr.bf16.mxu0 0
      %1140 = vmatpush2.bf16.msra.mxu0 0
      %1141 = vmatprep.subr.bf16.mxu0 0
      %1142 = vmatpush2.bf16.msra.mxu0 0
      %1143 = vmatprep.subr.bf16.mxu0 0
      %1144 = vmatpush2.bf16.msra.mxu0 0
      %1145 = vmatprep.subr.bf16.mxu0 0
      %1146 = vmatpush2.bf16.msra.mxu0 0
      %1147 = vmatprep.mubr.bf16.mxu0 0
      %1148 = vmatmul.mubr.bf16.gmra.mxu0 %v1110
      %v1149 = vpop.f32.mrf.mxu0
      %v1150 = vadd.f32 0.0, %v1149
      %v1151 = vpop.f32.mrf.mxu0
      %v1152 = vpop.f32.mrf.mxu0
      %v1153 = vpop.f32.mrf.mxu0
      %1154 = vdwg.mxu0
      %v1155 = vpack.c.bf16 %v1150, %v1150
      %v1156 = vpack.c.bf16 %v558, %v558
      %v1158 = vsel %vm561, %v1155, 0
      %v1161 = vsel %vm629, %v1156, 0
      %1163 = vmatprep.subr.bf16.mxu0 0
      %1164 = vmatpush1.bf16.msra.mxu0 0
      %1165 = vmatprep.subr.bf16.mxu0 0
      %1166 = vmatpush1.bf16.msra.mxu0 0
      %1167 = vmatprep.subr.bf16.mxu0 0
      %1168 = vmatpush1.bf16.msra.mxu0 0
      %1169 = vmatprep.subr.bf16.mxu0 0
      %1170 = vmatpush1.bf16.msra.mxu0 0
      %1171 = vmatprep.subr.bf16.mxu0 0
      %1172 = vmatpush1.bf16.msra.mxu0 0
      %1173 = vmatprep.subr.bf16.mxu0 0
      %1174 = vmatpush1.bf16.msra.mxu0 0
      %1175 = vmatprep.subr.bf16.mxu0 0
      %1176 = vmatpush1.bf16.msra.mxu0 0
      %1177 = vmatprep.subr.bf16.mxu0 0
      %1178 = vmatpush1.bf16.msra.mxu0 %v1161
      %1179 = vmatprep.subr.bf16.mxu0 0
      %1180 = vmatpush2.bf16.msra.mxu0 0
      %1181 = vmatprep.subr.bf16.mxu0 0
      %1182 = vmatpush2.bf16.msra.mxu0 0
      %1183 = vmatprep.subr.bf16.mxu0 0
      %1184 = vmatpush2.bf16.msra.mxu0 0
      %1185 = vmatprep.subr.bf16.mxu0 0
      %1186 = vmatpush2.bf16.msra.mxu0 0
      %1187 = vmatprep.subr.bf16.mxu0 0
      %1188 = vmatpush2.bf16.msra.mxu0 0
      %1189 = vmatprep.subr.bf16.mxu0 0
      %1190 = vmatpush2.bf16.msra.mxu0 0
      %1191 = vmatprep.subr.bf16.mxu0 0
      %1192 = vmatpush2.bf16.msra.mxu0 0
      %1193 = vmatprep.subr.bf16.mxu0 0
      %1194 = vmatpush2.bf16.msra.mxu0 0
      %1195 = vmatprep.mubr.bf16.mxu0 0
      %1196 = vmatmul.mubr.bf16.gmra.mxu0 %v1158
      %v1197 = vpop.f32.mrf.mxu0
      %v1198 = vadd.f32 0.0, %v1197
      %v1199 = vpop.f32.mrf.mxu0
      %v1200 = vpop.f32.mrf.mxu0
      %v1201 = vpop.f32.mrf.mxu0
      %1202 = vdwg.mxu0
      %v1203 = vadd.f32 %v1042, %v1198
      %v1204 = vld [vmem:[%s8] sm:$0x1]
      %v1206 = vlaneseq
      %v1207 = vshrl.u32 %v1206, 7
      %v1208 = vsub.s32 0, %v1207
      %v1209 = vrot.slane %v1204, %v1208
      %v1211 = vadd.f32 %v1203, %v1209
      %v1212 = vadd.f32 %v417, %v1211
      %v1213 = vld [vmem:[%s9] sm:$0x1]
      %v1214 = vld [vmem:[%s10] sm:$0x1]
      %v1215 = vsel %vm444, %v1212, 0.0
      %1216 = vadd.xlane.f32.xlu0 %v1215
      %v1217 = vpop.xlane.xlu0 %1216
      %v1218 = vrcp.pop 32.0
      %v1219 = vmul.f32 %v1217, %v1218
      %v1220 = vsub.f32 %v1212, %v1219
      %v1221 = vmul.f32 %v1220, %v1220
      %v1222 = vsel %vm444, %v1221, 0.0
      %1223 = vadd.xlane.f32.xlu0 %v1222
      %v1224 = vpop.xlane.xlu0 %1223
      %v1225 = vmul.f32 %v1224, %v1218
      %v1226 = vadd.f32 %v1225, 1e-05
      %v1227 = vrsqrt.pop %v1226
      %v1228 = vmul.f32 %v1220, %v1227
      %v1230 = vlaneseq
      %v1231 = vshrl.u32 %v1230, 7
      %v1232 = vsub.s32 0, %v1231
      %v1233 = vrot.slane %v1213, %v1232
      %v1235 = vmul.f32 %v1228, %v1233
      %v1237 = vlaneseq
      %v1238 = vshrl.u32 %v1237, 7
      %v1239 = vsub.s32 0, %v1238
      %v1240 = vrot.slane %v1214, %v1239
      %v1242 = vadd.f32 %v1235, %v1240
      %1243 = vst.msk [vmem:[%s415] sm:$0xff] %vm444, %v1242
      %p1244 = scmp.lt.s32.totalorder %s22, 1
      %s1245 = scalar_select %p1244, %s22, 1
      %s1246 = smul.addr %s1245, 8
      %s1247 = scalar_lea.vmem %s11, %s1246
      // Predicated region
      $region65: #{decoder_layer.3} parent=63 // pred_check
        %p1248 = pneg %p286
      $region66: #{decoder_layer.3} parent=63 // pred_check_branch
        %1250 = sbr.rel (%p1248) target = $region68
      $region67: #{decoder_layer.3} parent=63 // pred_region
        _
      $region68: #{decoder_layer.3} parent=63 // pred_fallthru
        _
    $region64: #{decoder_layer.3} parent=5 // pred_fallthru
      _
    %p1251 = scmp.le.s32.totalorder 2, %s17
    // Predicated region
    $region69: #{decoder_layer.3} parent=5 // pred_check
      %p1252 = pneg %p1251
    $region70: #{decoder_layer.3} parent=5 // pred_check_branch
      %1254 = sbr.rel (%p1252) target = $region72
    $region71: #{decoder_layer.3} parent=5 // pred_region
      %s1255 = ssub.s32 %s17, 2
      // Predicated region
      $region73: #{decoder_layer.3} parent=71 // pred_check
        %p1256 = pneg %p292
      $region74: #{decoder_layer.3} parent=71 // pred_check_branch
        %1258 = sbr.rel (%p1256) target = $region76
      $region75: #{decoder_layer.3} parent=71 // pred_region
        %p1259 = scmp.lt.s32.totalorder %s23, 1
        %s1260 = scalar_select %p1259, %s23, 1
        %s1261 = smul.addr %s1260, 8
        %s1262 = scalar_lea.vmem %s11, %s1261
      $region76: #{decoder_layer.3} parent=71 // pred_fallthru
        _
    $region72: #{decoder_layer.3} parent=5 // pred_fallthru
      _
  $region6: #{decoder_layer.3} parent=0 // loop_footer
    %s21 = sadd.s32 1, %s17
  $region7: #{decoder_layer.3} parent=0 // loop_footer_branch
    %16 = sbr.rel target = $region3
  $region8: #{decoder_layer.3} parent=0 // loop_exit
    _

</llo_original>
